<compile_context>
chip_gen: v5e
topology: v5e:2x2
jax: 0.10.0
libtpu: 0.0.40
codegen_flags: <defaults>
</compile_context>

<pallas_src>
import functools

import jax
import jax.numpy as jnp
from jax import lax
from jax.experimental import pallas as pl
from jax.experimental.pallas import tpu as pltpu

BN_EPS = 1e-5
LANE = 128


def _round_up(x, m):
    return (x + m - 1) // m * m


# ---------------------------------------------------------------------------
# Fused Pallas kernel: the entire forward pass in one call.
# ---------------------------------------------------------------------------
def _bn_relu(h, gamma, beta):
    # training-mode BatchNorm1d over the node axis (axis 0), biased variance.
    mean = jnp.mean(h, axis=0, keepdims=True)
    c = h - mean
    var = jnp.mean(c * c, axis=0, keepdims=True)
    return jnp.maximum(gamma * c * lax.rsqrt(var + BN_EPS) + beta, 0.0)


def fused_gcn_kernel(a_ref, x_ref,
                     w1_ref, b1_ref, g1_ref, be1_ref,
                     w2_ref, b2_ref, g2_ref, be2_ref,
                     w3_ref, b3_ref,
                     o_ref, *, num_classes, layer1_ax_first):
    a = a_ref[...]                       # [N, N]   (f32 or bf16 storage)
    x = x_ref[...]                       # [N, Fin]

    # ---- GCNConv1 + BN1 + ReLU -------------------------------------------
    # Contraction order chosen so the O(N^2) matmul carries min(Fin, Fout).
    if layer1_ax_first:                  # Fin <= Fout: (A @ X) @ W1
        ax = jnp.dot(a, x.astype(a.dtype), preferred_element_type=jnp.float32)
        h = jnp.dot(ax, w1_ref[...], preferred_element_type=jnp.float32)
    else:                                # Fout < Fin: A @ (X @ W1)
        xw = jnp.dot(x, w1_ref[...], preferred_element_type=jnp.float32)
        h = jnp.dot(a, xw.astype(a.dtype), preferred_element_type=jnp.float32)
    h = _bn_relu(h + b1_ref[...], g1_ref[...], be1_ref[...])

    # ---- GCNConv2 + BN2 + ReLU  (Fout=384pad < Fin=512 -> A @ (H @ W2)) ----
    hw = jnp.dot(h, w2_ref[...], preferred_element_type=jnp.float32)
    h2 = jnp.dot(a, hw.astype(a.dtype), preferred_element_type=jnp.float32)
    h2 = _bn_relu(h2 + b2_ref[...], g2_ref[...], be2_ref[...])

    # ---- Linear + ReLU + masked log_softmax on the lane-dense padded slab --
    y = jnp.dot(h2, w3_ref[...], preferred_element_type=jnp.float32) + b3_ref[...]
    y = jnp.maximum(y, 0.0)
    col = lax.broadcasted_iota(jnp.int32, y.shape, 1)
    y = jnp.where(col < num_classes, y, -jnp.inf)      # padded classes -> -inf
    m = jnp.max(y, axis=1, keepdims=True)
    z = y - m
    lse = jnp.log(jnp.sum(jnp.exp(z), axis=1, keepdims=True))  # exp(-inf)=0
    o_ref[...] = z - lse


# ---------------------------------------------------------------------------
# pallas_call wrapper (everything fits in VMEM at these sizes; grid=(1,))
# ---------------------------------------------------------------------------
def _full_spec(shape):
    # Full-array block (satisfies the "block equals full dims" rule).
    return pl.BlockSpec(shape, lambda i: tuple(0 for _ in shape))


def gcn_forward_fused(params, x, a_hat, *, adj_dtype=jnp.float32):
    n, fin = x.shape
    h1 = params["w1"].shape[1]
    h2 = params["w2"].shape[1]
    ncls = params["w3"].shape[1]
    h2p = _round_up(h2, LANE)                 # 300 -> 384 (lane-dense)
    cp = _round_up(ncls, LANE)                # 6   -> 128 (lane-dense store)

    a = a_hat.astype(adj_dtype)               # bf16 storage optional; acc stays f32

    # per-feature vectors as (1, F) rows
    b1 = params["b1"].reshape(1, h1)
    g1 = params["g1"].reshape(1, h1)
    be1 = params["be1"].reshape(1, h1)

    # zero-pad hidden2 / class dims (padded columns are exactly 0 through BN+ReLU
    # because gamma_pad=1, beta_pad=0, and padded W3 rows are 0 -> no effect).
    w2 = jnp.zeros((h1, h2p), jnp.float32).at[:, :h2].set(params["w2"])
    b2 = jnp.zeros((1, h2p), jnp.float32).at[0, :h2].set(params["b2"])
    g2 = jnp.ones((1, h2p), jnp.float32).at[0, :h2].set(params["g2"])
    be2 = jnp.zeros((1, h2p), jnp.float32).at[0, :h2].set(params["be2"])
    w3 = jnp.zeros((h2p, cp), jnp.float32).at[:h2, :ncls].set(params["w3"])
    b3 = jnp.zeros((1, cp), jnp.float32).at[0, :ncls].set(params["b3"])

    operands = (a, x, params["w1"], b1, g1, be1, w2, b2, g2, be2, w3, b3)

    out_pad = pl.pallas_call(
        functools.partial(fused_gcn_kernel,
                          num_classes=ncls,
                          layer1_ax_first=(fin <= h1)),
        out_shape=jax.ShapeDtypeStruct((n, cp), jnp.float32),
        grid=(1,),
        in_specs=[_full_spec(o.shape) for o in operands],
        out_specs=_full_spec((n, cp)),
        compiler_params=pltpu.CompilerParams(
            dimension_semantics=("arbitrary",)),
    )(*operands)
    return out_pad[:, :ncls]


# ---------------------------------------------------------------------------
# Graph glue: build GCN-normalized dense adjacency from edge_index/edge_weight
# ---------------------------------------------------------------------------
def build_normalized_adjacency(edge_index, edge_weight, num_nodes):
    src = edge_index[0]
    dst = edge_index[1]
    a = jnp.zeros((num_nodes, num_nodes), jnp.float32)
    a = a.at[dst, src].add(edge_weight)                 # A[dst, src] = w
    a = a + jnp.eye(num_nodes, dtype=jnp.float32)       # self-loops (fill=1.0)
    deg = jnp.sum(a, axis=1)                            # in-degree per dst
    dinv = jnp.where(deg > 0, lax.rsqrt(deg), 0.0)
    return dinv[:, None] * a * dinv[None, :]            # D^-1/2 A D^-1/2


# ---------------------------------------------------------------------------
# Model: parameters + forward
# ---------------------------------------------------------------------------
def init_params(key, input_dim, output_dim):
    h1, h2 = 512, 300
    ks = jax.random.split(key, 6)

    def glorot(k, fan_in, fan_out):
        lim = jnp.sqrt(6.0 / (fan_in + fan_out))
        return jax.random.uniform(k, (fan_in, fan_out), jnp.float32, -lim, lim)

    return {
        "w1": glorot(ks[0], input_dim, h1),
        "b1": jnp.zeros((h1,), jnp.float32),
        "g1": 1.0 + 0.1 * jax.random.normal(ks[1], (h1,), jnp.float32),
        "be1": 0.1 * jax.random.normal(ks[2], (h1,), jnp.float32),
        "w2": glorot(ks[3], h1, h2),
        "b2": jnp.zeros((h2,), jnp.float32),
        "g2": 1.0 + 0.1 * jax.random.normal(ks[4], (h2,), jnp.float32),
        "be2": 0.1 * jax.random.normal(ks[5], (h2,), jnp.float32),
        "w3": glorot(jax.random.fold_in(key, 99), h2, output_dim),
        "b3": jnp.zeros((output_dim,), jnp.float32),
    }


@functools.partial(jax.jit, static_argnames=("num_nodes", "adj_dtype"))
def gcn_forward(params, x, edge_index, edge_weight, num_nodes,
                adj_dtype=jnp.float32):
    a_hat = build_normalized_adjacency(edge_index, edge_weight, num_nodes)
    return gcn_forward_fused(params, x, a_hat, adj_dtype=adj_dtype)


# pure-JAX reference for a sanity check
def gcn_forward_ref(params, x, edge_index, edge_weight, num_nodes):
    a_hat = build_normalized_adjacency(edge_index, edge_weight, num_nodes)

    def layer(a, x, w, b, g, be):
        h = a @ (x @ w) + b
        mean = h.mean(0, keepdims=True)
        var = ((h - mean) ** 2).mean(0, keepdims=True)
        return jnp.maximum(g * (h - mean) * lax.rsqrt(var + BN_EPS) + be, 0.0)

    h = layer(a_hat, x, params["w1"], params["b1"], params["g1"], params["be1"])
    h = layer(a_hat, h, params["w2"], params["b2"], params["g2"], params["be2"])
    y = jnp.maximum(h @ params["w3"] + params["b3"], 0.0)
    return jax.nn.log_softmax(y, axis=1)


if __name__ == "__main__":
    key = jax.random.PRNGKey(0)
    num_nodes = 16
    input_dim = 8
    output_dim = 6
    num_edges = 32

    k_x, k_src, k_dst, k_w, k_p = jax.random.split(key, 5)
    x = jax.random.normal(k_x, (num_nodes, input_dim), jnp.float32)
    edge_index = jnp.stack(
        [
            jax.random.randint(k_src, (num_edges,), 0, num_nodes),
            jax.random.randint(k_dst, (num_edges,), 0, num_nodes),
        ],
        axis=0,
    )
    edge_weight = jax.random.uniform(k_w, (num_edges,), jnp.float32, 0.5, 1.5)

    params = init_params(k_p, input_dim, output_dim)

    # f32 adjacency path: must match the pure-JAX reference closely.
    out = gcn_forward(params, x, edge_index, edge_weight, num_nodes)
    out = jax.block_until_ready(out)
    assert out.shape == (num_nodes, output_dim)

    ref = gcn_forward_ref(params, x, edge_index, edge_weight, num_nodes)
    assert jnp.allclose(out, ref, atol=1e-4, rtol=1e-4), "mismatch vs reference"

    # bf16 adjacency storage path (v6e/v7x-friendly); check it runs and is finite.
    out_bf16 = jax.block_until_ready(
        gcn_forward(params, x, edge_index, edge_weight, num_nodes,
                    adj_dtype=jnp.bfloat16))
    assert out_bf16.shape == (num_nodes, output_dim)
    assert bool(jnp.all(jnp.isfinite(out_bf16)))

    print("KERNEL_OK")
</pallas_src>

<mosaic_0001>
module attributes {stable_mosaic.version = 11 : i64} {
  func.func @fused_gcn_kernel(%arg0: i32, %arg1: memref<16x16xf32, #tpu.memory_space<vmem>>, %arg2: memref<16x8xf32, #tpu.memory_space<vmem>>, %arg3: memref<8x512xf32, #tpu.memory_space<vmem>>, %arg4: memref<1x512xf32, #tpu.memory_space<vmem>>, %arg5: memref<1x512xf32, #tpu.memory_space<vmem>>, %arg6: memref<1x512xf32, #tpu.memory_space<vmem>>, %arg7: memref<512x384xf32, #tpu.memory_space<vmem>>, %arg8: memref<1x384xf32, #tpu.memory_space<vmem>>, %arg9: memref<1x384xf32, #tpu.memory_space<vmem>>, %arg10: memref<1x384xf32, #tpu.memory_space<vmem>>, %arg11: memref<384x128xf32, #tpu.memory_space<vmem>>, %arg12: memref<1x128xf32, #tpu.memory_space<vmem>>, %arg13: memref<16x128xf32, #tpu.memory_space<vmem>>) attributes {dimension_semantics = [#tpu.dimension_semantics<arbitrary>], iteration_bounds = array<i64: 1>, scalar_prefetch = 0 : i64, scratch_operands = 0 : i64, tpu.core_type = #tpu.core_type<tc>, window_params = [{pipeline_mode = #tpu.pipeline_mode<synchronous>, transform_indices = @transform_0, window_bounds = array<i64: 16, 16>}, {pipeline_mode = #tpu.pipeline_mode<synchronous>, transform_indices = @transform_1, window_bounds = array<i64: 16, 8>}, {pipeline_mode = #tpu.pipeline_mode<synchronous>, transform_indices = @transform_2, window_bounds = array<i64: 8, 512>}, {pipeline_mode = #tpu.pipeline_mode<synchronous>, transform_indices = @transform_3, window_bounds = array<i64: 1, 512>}, {pipeline_mode = #tpu.pipeline_mode<synchronous>, transform_indices = @transform_4, window_bounds = array<i64: 1, 512>}, {pipeline_mode = #tpu.pipeline_mode<synchronous>, transform_indices = @transform_5, window_bounds = array<i64: 1, 512>}, {pipeline_mode = #tpu.pipeline_mode<synchronous>, transform_indices = @transform_6, window_bounds = array<i64: 512, 384>}, {pipeline_mode = #tpu.pipeline_mode<synchronous>, transform_indices = @transform_7, window_bounds = array<i64: 1, 384>}, {pipeline_mode = #tpu.pipeline_mode<synchronous>, transform_indices = @transform_8, window_bounds = array<i64: 1, 384>}, {pipeline_mode = #tpu.pipeline_mode<synchronous>, transform_indices = @transform_9, window_bounds = array<i64: 1, 384>}, {pipeline_mode = #tpu.pipeline_mode<synchronous>, transform_indices = @transform_10, window_bounds = array<i64: 384, 128>}, {pipeline_mode = #tpu.pipeline_mode<synchronous>, transform_indices = @transform_11, window_bounds = array<i64: 1, 128>}, {pipeline_mode = #tpu.pipeline_mode<synchronous>, transform_indices = @transform_12, window_bounds = array<i64: 16, 128>}]} {
    %c0 = arith.constant 0 : index
    %c0_0 = arith.constant 0 : index
    %0 = vector.load %arg1[%c0, %c0_0] : memref<16x16xf32, #tpu.memory_space<vmem>>, vector<16x16xf32>
    %c0_1 = arith.constant 0 : index
    %c0_2 = arith.constant 0 : index
    %1 = vector.load %arg2[%c0_1, %c0_2] : memref<16x8xf32, #tpu.memory_space<vmem>>, vector<16x8xf32>
    %cst = arith.constant dense<0.000000e+00> : vector<16x8xf32>
    %2 = tpu.matmul %0, %1, %cst {dimension_numbers = #tpu.dot_dimension_numbers<[1], [0], [0], [1], [0, 0, 1, 1], [], []>} : vector<16x16xf32>, vector<16x8xf32>, vector<16x8xf32> -> vector<16x8xf32>
    %c0_3 = arith.constant 0 : index
    %c0_4 = arith.constant 0 : index
    %3 = vector.load %arg3[%c0_3, %c0_4] : memref<8x512xf32, #tpu.memory_space<vmem>>, vector<8x512xf32>
    %cst_5 = arith.constant dense<0.000000e+00> : vector<16x512xf32>
    %4 = tpu.matmul %2, %3, %cst_5 {dimension_numbers = #tpu.dot_dimension_numbers<[1], [0], [0], [1], [0, 0, 1, 1], [], []>} : vector<16x8xf32>, vector<8x512xf32>, vector<16x512xf32> -> vector<16x512xf32>
    %c0_6 = arith.constant 0 : index
    %c0_7 = arith.constant 0 : index
    %5 = vector.load %arg4[%c0_6, %c0_7] : memref<1x512xf32, #tpu.memory_space<vmem>>, vector<1x512xf32>
    %6 = vector.broadcast %5 : vector<1x512xf32> to vector<16x512xf32>
    %7 = arith.addf %4, %6 : vector<16x512xf32>
    %c0_8 = arith.constant 0 : index
    %c0_9 = arith.constant 0 : index
    %8 = vector.load %arg5[%c0_8, %c0_9] : memref<1x512xf32, #tpu.memory_space<vmem>>, vector<1x512xf32>
    %c0_10 = arith.constant 0 : index
    %c0_11 = arith.constant 0 : index
    %9 = vector.load %arg6[%c0_10, %c0_11] : memref<1x512xf32, #tpu.memory_space<vmem>>, vector<1x512xf32>
    %cst_12 = arith.constant dense<0.000000e+00> : vector<512xf32>
    %10 = vector.multi_reduction <add>, %7, %cst_12 [0] : vector<16x512xf32> to vector<512xf32>
    %11 = vector.shape_cast %10 : vector<512xf32> to vector<1x512xf32>
    %cst_13 = arith.constant 1.600000e+01 : f32
    %12 = vector.broadcast %cst_13 : f32 to vector<1x512xf32>
    %13 = arith.divf %11, %12 : vector<1x512xf32>
    %14 = vector.broadcast %13 : vector<1x512xf32> to vector<16x512xf32>
    %15 = arith.subf %7, %14 : vector<16x512xf32>
    %16 = arith.mulf %15, %15 : vector<16x512xf32>
    %cst_14 = arith.constant dense<0.000000e+00> : vector<512xf32>
    %17 = vector.multi_reduction <add>, %16, %cst_14 [0] : vector<16x512xf32> to vector<512xf32>
    %18 = vector.shape_cast %17 : vector<512xf32> to vector<1x512xf32>
    %cst_15 = arith.constant 1.600000e+01 : f32
    %19 = vector.broadcast %cst_15 : f32 to vector<1x512xf32>
    %20 = arith.divf %18, %19 : vector<1x512xf32>
    %21 = vector.broadcast %8 : vector<1x512xf32> to vector<16x512xf32>
    %22 = arith.mulf %21, %15 : vector<16x512xf32>
    %cst_16 = arith.constant 9.99999974E-6 : f32
    %23 = vector.broadcast %cst_16 : f32 to vector<1x512xf32>
    %24 = arith.addf %20, %23 : vector<1x512xf32>
    %25 = math.rsqrt %24 : vector<1x512xf32>
    %26 = vector.broadcast %25 : vector<1x512xf32> to vector<16x512xf32>
    %27 = arith.mulf %22, %26 : vector<16x512xf32>
    %28 = vector.broadcast %9 : vector<1x512xf32> to vector<16x512xf32>
    %29 = arith.addf %27, %28 : vector<16x512xf32>
    %cst_17 = arith.constant 0.000000e+00 : f32
    %30 = vector.broadcast %cst_17 : f32 to vector<16x512xf32>
    %31 = arith.maximumf %29, %30 : vector<16x512xf32>
    %c0_18 = arith.constant 0 : index
    %c0_19 = arith.constant 0 : index
    %32 = vector.load %arg7[%c0_18, %c0_19] : memref<512x384xf32, #tpu.memory_space<vmem>>, vector<512x384xf32>
    %cst_20 = arith.constant dense<0.000000e+00> : vector<16x384xf32>
    %33 = tpu.matmul %31, %32, %cst_20 {dimension_numbers = #tpu.dot_dimension_numbers<[1], [0], [0], [1], [0, 0, 1, 1], [], []>} : vector<16x512xf32>, vector<512x384xf32>, vector<16x384xf32> -> vector<16x384xf32>
    %cst_21 = arith.constant dense<0.000000e+00> : vector<16x384xf32>
    %34 = tpu.matmul %0, %33, %cst_21 {dimension_numbers = #tpu.dot_dimension_numbers<[1], [0], [0], [1], [0, 0, 1, 1], [], []>} : vector<16x16xf32>, vector<16x384xf32>, vector<16x384xf32> -> vector<16x384xf32>
    %c0_22 = arith.constant 0 : index
    %c0_23 = arith.constant 0 : index
    %35 = vector.load %arg8[%c0_22, %c0_23] : memref<1x384xf32, #tpu.memory_space<vmem>>, vector<1x384xf32>
    %36 = vector.broadcast %35 : vector<1x384xf32> to vector<16x384xf32>
    %37 = arith.addf %34, %36 : vector<16x384xf32>
    %c0_24 = arith.constant 0 : index
    %c0_25 = arith.constant 0 : index
    %38 = vector.load %arg9[%c0_24, %c0_25] : memref<1x384xf32, #tpu.memory_space<vmem>>, vector<1x384xf32>
    %c0_26 = arith.constant 0 : index
    %c0_27 = arith.constant 0 : index
    %39 = vector.load %arg10[%c0_26, %c0_27] : memref<1x384xf32, #tpu.memory_space<vmem>>, vector<1x384xf32>
    %cst_28 = arith.constant dense<0.000000e+00> : vector<384xf32>
    %40 = vector.multi_reduction <add>, %37, %cst_28 [0] : vector<16x384xf32> to vector<384xf32>
    %41 = vector.shape_cast %40 : vector<384xf32> to vector<1x384xf32>
    %cst_29 = arith.constant 1.600000e+01 : f32
    %42 = vector.broadcast %cst_29 : f32 to vector<1x384xf32>
    %43 = arith.divf %41, %42 : vector<1x384xf32>
    %44 = vector.broadcast %43 : vector<1x384xf32> to vector<16x384xf32>
    %45 = arith.subf %37, %44 : vector<16x384xf32>
    %46 = arith.mulf %45, %45 : vector<16x384xf32>
    %cst_30 = arith.constant dense<0.000000e+00> : vector<384xf32>
    %47 = vector.multi_reduction <add>, %46, %cst_30 [0] : vector<16x384xf32> to vector<384xf32>
    %48 = vector.shape_cast %47 : vector<384xf32> to vector<1x384xf32>
    %cst_31 = arith.constant 1.600000e+01 : f32
    %49 = vector.broadcast %cst_31 : f32 to vector<1x384xf32>
    %50 = arith.divf %48, %49 : vector<1x384xf32>
    %51 = vector.broadcast %38 : vector<1x384xf32> to vector<16x384xf32>
    %52 = arith.mulf %51, %45 : vector<16x384xf32>
    %cst_32 = arith.constant 9.99999974E-6 : f32
    %53 = vector.broadcast %cst_32 : f32 to vector<1x384xf32>
    %54 = arith.addf %50, %53 : vector<1x384xf32>
    %55 = math.rsqrt %54 : vector<1x384xf32>
    %56 = vector.broadcast %55 : vector<1x384xf32> to vector<16x384xf32>
    %57 = arith.mulf %52, %56 : vector<16x384xf32>
    %58 = vector.broadcast %39 : vector<1x384xf32> to vector<16x384xf32>
    %59 = arith.addf %57, %58 : vector<16x384xf32>
    %cst_33 = arith.constant 0.000000e+00 : f32
    %60 = vector.broadcast %cst_33 : f32 to vector<16x384xf32>
    %61 = arith.maximumf %59, %60 : vector<16x384xf32>
    %c0_34 = arith.constant 0 : index
    %c0_35 = arith.constant 0 : index
    %62 = vector.load %arg11[%c0_34, %c0_35] : memref<384x128xf32, #tpu.memory_space<vmem>>, vector<384x128xf32>
    %cst_36 = arith.constant dense<0.000000e+00> : vector<16x128xf32>
    %63 = tpu.matmul %61, %62, %cst_36 {dimension_numbers = #tpu.dot_dimension_numbers<[1], [0], [0], [1], [0, 0, 1, 1], [], []>} : vector<16x384xf32>, vector<384x128xf32>, vector<16x128xf32> -> vector<16x128xf32>
    %c0_37 = arith.constant 0 : index
    %c0_38 = arith.constant 0 : index
    %64 = vector.load %arg12[%c0_37, %c0_38] : memref<1x128xf32, #tpu.memory_space<vmem>>, vector<1x128xf32>
    %65 = vector.broadcast %64 : vector<1x128xf32> to vector<16x128xf32>
    %66 = arith.addf %63, %65 : vector<16x128xf32>
    %cst_39 = arith.constant 0.000000e+00 : f32
    %67 = vector.broadcast %cst_39 : f32 to vector<16x128xf32>
    %68 = arith.maximumf %66, %67 : vector<16x128xf32>
    %69 = tpu.iota {dimensions = array<i32: 1>} : vector<16x128xi32>
    %c6_i32 = arith.constant 6 : i32
    %70 = vector.broadcast %c6_i32 : i32 to vector<16x128xi32>
    %71 = arith.cmpi slt, %69, %70 : vector<16x128xi32>
    %cst_40 = arith.constant 0xFF800000 : f32
    %72 = vector.broadcast %cst_40 : f32 to vector<16x128xf32>
    %73 = arith.select %71, %68, %72 : vector<16x128xi1>, vector<16x128xf32>
    %cst_41 = arith.constant dense<0xFF800000> : vector<16xf32>
    %74 = vector.multi_reduction <maximumf>, %73, %cst_41 [1] : vector<16x128xf32> to vector<16xf32>
    %75 = vector.shape_cast %74 : vector<16xf32> to vector<16x1xf32>
    %76 = vector.broadcast %75 : vector<16x1xf32> to vector<16x128xf32>
    %77 = arith.subf %73, %76 : vector<16x128xf32>
    %78 = math.exp %77 : vector<16x128xf32>
    %cst_42 = arith.constant dense<0.000000e+00> : vector<16xf32>
    %79 = vector.multi_reduction <add>, %78, %cst_42 [1] : vector<16x128xf32> to vector<16xf32>
    %80 = vector.shape_cast %79 : vector<16xf32> to vector<16x1xf32>
    %81 = math.log %80 : vector<16x1xf32>
    %82 = vector.broadcast %81 : vector<16x1xf32> to vector<16x128xf32>
    %83 = arith.subf %77, %82 : vector<16x128xf32>
    %c0_43 = arith.constant 0 : index
    %c0_44 = arith.constant 0 : index
    %84 = vector.load %arg13[%c0_43, %c0_44] : memref<16x128xf32, #tpu.memory_space<vmem>>, vector<16x128xf32>
    tpu.vector_store %arg13[%c0_43, %c0_44], %83 {strides = array<i32>} : memref<16x128xf32, #tpu.memory_space<vmem>>, vector<16x128xf32>,
    return
  }
  func.func @transform_0(%arg0: i32) -> (i32, i32) {
    %c0_i32 = arith.constant 0 : i32
    %c0_i32_0 = arith.constant 0 : i32
    %c0_i32_1 = arith.constant 0 : i32
    return %c0_i32, %c0_i32_0 : i32, i32
  }
  func.func @transform_1(%arg0: i32) -> (i32, i32) {
    %c0_i32 = arith.constant 0 : i32
    %c0_i32_0 = arith.constant 0 : i32
    %c0_i32_1 = arith.constant 0 : i32
    return %c0_i32, %c0_i32_0 : i32, i32
  }
  func.func @transform_2(%arg0: i32) -> (i32, i32) {
    %c0_i32 = arith.constant 0 : i32
    %c0_i32_0 = arith.constant 0 : i32
    %c0_i32_1 = arith.constant 0 : i32
    return %c0_i32, %c0_i32_0 : i32, i32
  }
  func.func @transform_3(%arg0: i32) -> (i32, i32) {
    %c0_i32 = arith.constant 0 : i32
    %c0_i32_0 = arith.constant 0 : i32
    %c0_i32_1 = arith.constant 0 : i32
    return %c0_i32, %c0_i32_0 : i32, i32
  }
  func.func @transform_4(%arg0: i32) -> (i32, i32) {
    %c0_i32 = arith.constant 0 : i32
    %c0_i32_0 = arith.constant 0 : i32
    %c0_i32_1 = arith.constant 0 : i32
    return %c0_i32, %c0_i32_0 : i32, i32
  }
  func.func @transform_5(%arg0: i32) -> (i32, i32) {
    %c0_i32 = arith.constant 0 : i32
    %c0_i32_0 = arith.constant 0 : i32
    %c0_i32_1 = arith.constant 0 : i32
    return %c0_i32, %c0_i32_0 : i32, i32
  }
  func.func @transform_6(%arg0: i32) -> (i32, i32) {
    %c0_i32 = arith.constant 0 : i32
    %c0_i32_0 = arith.constant 0 : i32
    %c0_i32_1 = arith.constant 0 : i32
    return %c0_i32, %c0_i32_0 : i32, i32
  }
  func.func @transform_7(%arg0: i32) -> (i32, i32) {
    %c0_i32 = arith.constant 0 : i32
    %c0_i32_0 = arith.constant 0 : i32
    %c0_i32_1 = arith.constant 0 : i32
    return %c0_i32, %c0_i32_0 : i32, i32
  }
  func.func @transform_8(%arg0: i32) -> (i32, i32) {
    %c0_i32 = arith.constant 0 : i32
    %c0_i32_0 = arith.constant 0 : i32
    %c0_i32_1 = arith.constant 0 : i32
    return %c0_i32, %c0_i32_0 : i32, i32
  }
  func.func @transform_9(%arg0: i32) -> (i32, i32) {
    %c0_i32 = arith.constant 0 : i32
    %c0_i32_0 = arith.constant 0 : i32
    %c0_i32_1 = arith.constant 0 : i32
    return %c0_i32, %c0_i32_0 : i32, i32
  }
  func.func @transform_10(%arg0: i32) -> (i32, i32) {
    %c0_i32 = arith.constant 0 : i32
    %c0_i32_0 = arith.constant 0 : i32
    %c0_i32_1 = arith.constant 0 : i32
    return %c0_i32, %c0_i32_0 : i32, i32
  }
  func.func @transform_11(%arg0: i32) -> (i32, i32) {
    %c0_i32 = arith.constant 0 : i32
    %c0_i32_0 = arith.constant 0 : i32
    %c0_i32_1 = arith.constant 0 : i32
    return %c0_i32, %c0_i32_0 : i32, i32
  }
  func.func @transform_12(%arg0: i32) -> (i32, i32) {
    %c0_i32 = arith.constant 0 : i32
    %c0_i32_0 = arith.constant 0 : i32
    %c0_i32_1 = arith.constant 0 : i32
    return %c0_i32, %c0_i32_0 : i32, i32
  }
}

</mosaic_0001>

<llo_original>
// kernel: gcn_forward.1
$region0: #{gcn_forward.1}
  #allocation0 [shape = 'u32[]', space=smem, size = 0x4, offset = 0x4, fixed_abs, tag = 'smem constant byte address 0x4 - core index']
  #allocation1 [shape = 'u32[72,128]{1,0:T(1,128)}', space=vmem, size = 0x9000, scoped, tag = 'internal scratch']
  %s0 = inlined_call_operand.vmem [shape: f32[16,16], index: 0, kind: input, shape index: {}]
  %s1 = inlined_call_operand.vmem [shape: f32[16,8], index: 1, kind: input, shape index: {}]
  %s2 = inlined_call_operand.vmem [shape: f32[8,512], index: 2, kind: input, shape index: {}]
  %s3 = inlined_call_operand.vmem [shape: f32[1,512], index: 3, kind: input, shape index: {}]
  %s4 = inlined_call_operand.vmem [shape: f32[1,512], index: 4, kind: input, shape index: {}]
  %s5 = inlined_call_operand.vmem [shape: f32[1,512], index: 5, kind: input, shape index: {}]
  %s6 = inlined_call_operand.vmem [shape: f32[512,384], index: 6, kind: input, shape index: {}]
  %s7 = inlined_call_operand.vmem [shape: f32[1,384], index: 7, kind: input, shape index: {}]
  %s8 = inlined_call_operand.vmem [shape: f32[1,384], index: 8, kind: input, shape index: {}]
  %s9 = inlined_call_operand.vmem [shape: f32[1,384], index: 9, kind: input, shape index: {}]
  %s10 = inlined_call_operand.vmem [shape: f32[384,128], index: 10, kind: input, shape index: {}]
  %s11 = inlined_call_operand.vmem [shape: f32[1,128], index: 11, kind: input, shape index: {}]
  %s12 = inlined_call_operand.vmem [shape: f32[16,128], index: 12, kind: output, shape index: {}]
  %s13 = sld [smem:[#allocation0]]
  $region58: #{gcn_forward.1} parent=0
    _
  %s15 = ssub.s32 1, %s13
  %s16 = scalar_select 0, %s15, %s13
  // Predicated region
  $region2: #{gcn_forward.1} parent=0 // pred_check
    _
  $region3: #{gcn_forward.1} parent=0 // pred_check_branch
    %18 = sbr.rel (0) target = $region5
  $region4: #{gcn_forward.1} parent=0 // pred_region
    _
  $region5: #{gcn_forward.1} parent=0 // pred_fallthru
    _
  // Predicated region
  $region6: #{gcn_forward.1} parent=0 // pred_check
    _
  $region7: #{gcn_forward.1} parent=0 // pred_check_branch
    %20 = sbr.rel (0) target = $region9
  $region8: #{gcn_forward.1} parent=0 // pred_region
    _
  $region9: #{gcn_forward.1} parent=0 // pred_fallthru
    _
  // Predicated region
  $region10: #{gcn_forward.1} parent=0 // pred_check
    _
  $region11: #{gcn_forward.1} parent=0 // pred_check_branch
    %22 = sbr.rel (0) target = $region13
  $region12: #{gcn_forward.1} parent=0 // pred_region
    _
  $region13: #{gcn_forward.1} parent=0 // pred_fallthru
    _
  // Predicated region
  $region14: #{gcn_forward.1} parent=0 // pred_check
    _
  $region15: #{gcn_forward.1} parent=0 // pred_check_branch
    %24 = sbr.rel (0) target = $region17
  $region16: #{gcn_forward.1} parent=0 // pred_region
    _
  $region17: #{gcn_forward.1} parent=0 // pred_fallthru
    _
  // Predicated region
  $region18: #{gcn_forward.1} parent=0 // pred_check
    _
  $region19: #{gcn_forward.1} parent=0 // pred_check_branch
    %26 = sbr.rel (0) target = $region21
  $region20: #{gcn_forward.1} parent=0 // pred_region
    _
  $region21: #{gcn_forward.1} parent=0 // pred_fallthru
    _
  // Predicated region
  $region22: #{gcn_forward.1} parent=0 // pred_check
    _
  $region23: #{gcn_forward.1} parent=0 // pred_check_branch
    %28 = sbr.rel (0) target = $region25
  $region24: #{gcn_forward.1} parent=0 // pred_region
    _
  $region25: #{gcn_forward.1} parent=0 // pred_fallthru
    _
  // Predicated region
  $region26: #{gcn_forward.1} parent=0 // pred_check
    _
  $region27: #{gcn_forward.1} parent=0 // pred_check_branch
    %30 = sbr.rel (0) target = $region29
  $region28: #{gcn_forward.1} parent=0 // pred_region
    _
  $region29: #{gcn_forward.1} parent=0 // pred_fallthru
    _
  // Predicated region
  $region30: #{gcn_forward.1} parent=0 // pred_check
    _
  $region31: #{gcn_forward.1} parent=0 // pred_check_branch
    %32 = sbr.rel (0) target = $region33
  $region32: #{gcn_forward.1} parent=0 // pred_region
    _
  $region33: #{gcn_forward.1} parent=0 // pred_fallthru
    _
  // Predicated region
  $region34: #{gcn_forward.1} parent=0 // pred_check
    _
  $region35: #{gcn_forward.1} parent=0 // pred_check_branch
    %34 = sbr.rel (0) target = $region37
  $region36: #{gcn_forward.1} parent=0 // pred_region
    _
  $region37: #{gcn_forward.1} parent=0 // pred_fallthru
    _
  // Predicated region
  $region38: #{gcn_forward.1} parent=0 // pred_check
    _
  $region39: #{gcn_forward.1} parent=0 // pred_check_branch
    %36 = sbr.rel (0) target = $region41
  $region40: #{gcn_forward.1} parent=0 // pred_region
    _
  $region41: #{gcn_forward.1} parent=0 // pred_fallthru
    _
  // Predicated region
  $region42: #{gcn_forward.1} parent=0 // pred_check
    _
  $region43: #{gcn_forward.1} parent=0 // pred_check_branch
    %38 = sbr.rel (0) target = $region45
  $region44: #{gcn_forward.1} parent=0 // pred_region
    _
  $region45: #{gcn_forward.1} parent=0 // pred_fallthru
    _
  // Predicated region
  $region46: #{gcn_forward.1} parent=0 // pred_check
    _
  $region47: #{gcn_forward.1} parent=0 // pred_check_branch
    %40 = sbr.rel (0) target = $region49
  $region48: #{gcn_forward.1} parent=0 // pred_region
    _
  $region49: #{gcn_forward.1} parent=0 // pred_fallthru
    _
  %v41 = vld [vmem:[%s0] sm:$0xff]
  %v42 = vld [vmem:[%s0 + $0x8] sm:$0xff]
  %v43 = vld [vmem:[%s1] sm:$0xff]
  %v44 = vld [vmem:[%s1 + $0x8] sm:$0xff]
  %vm45 = vcmask 130048
  %v47 = vsel %vm45, %v41, 0
  %v50 = vsel %vm45, %v42, 0
  %52 = vmatpush.msra.mxu0 0.0
  %53 = vmatpush.msra.mxu0 0.0
  %54 = vmatpush.msra.mxu0 0.0
  %55 = vmatpush.msra.mxu0 0.0
  %56 = vmatpush.msra.mxu0 0.0
  %57 = vmatpush.msra.mxu0 0.0
  %58 = vmatpush.msra.mxu0 0.0
  %59 = vmatpush.msra.mxu0 0.0
  %60 = vmatpush.msra.mxu0 0.0
  %61 = vmatpush.msra.mxu0 0.0
  %62 = vmatpush.msra.mxu0 0.0
  %63 = vmatpush.msra.mxu0 0.0
  %64 = vmatpush.msra.mxu0 0.0
  %65 = vmatpush.msra.mxu0 0.0
  %66 = vmatpush.msra.mxu0 %v44
  %67 = vmatpush.msra.mxu0 %v43
  %68 = vmatmul.f32.gmra.mxu0 %v47
  %v69 = vpop.f32.mrf.mxu0
  %v70 = vadd.f32 0.0, %v69
  %71 = vmatmul.f32.gmra.mxu0 %v50
  %v72 = vpop.f32.mrf.mxu0
  %v73 = vadd.f32 0.0, %v72
  %74 = vdwg.mxu0
  %v75 = vld [vmem:[%s2] sm:$0xff]
  %v76 = vld [vmem:[%s2 + $0x8] sm:$0xff]
  %v77 = vld [vmem:[%s2 + $0x10] sm:$0xff]
  %v78 = vld [vmem:[%s2 + $0x18] sm:$0xff]
  %v79 = vld [vmem:[%s3] sm:$0xf]
  %v81 = vperm.slane %v79, 0
  %v82 = vperm.slane %v79, 1
  %v83 = vperm.slane %v79, 2
  %v84 = vperm.slane %v79, 3
  %vm89 = vcmask 64512
  %v91 = vsel %vm89, %v70, 0
  %v94 = vsel %vm89, %v73, 0
  %96 = vmatpush.msra.mxu0 0.0
  %97 = vmatpush.msra.mxu0 0.0
  %98 = vmatpush.msra.mxu0 0.0
  %99 = vmatpush.msra.mxu0 0.0
  %100 = vmatpush.msra.mxu0 0.0
  %101 = vmatpush.msra.mxu0 0.0
  %102 = vmatpush.msra.mxu0 0.0
  %103 = vmatpush.msra.mxu0 0.0
  %104 = vmatpush.msra.mxu0 0.0
  %105 = vmatpush.msra.mxu0 0.0
  %106 = vmatpush.msra.mxu0 0.0
  %107 = vmatpush.msra.mxu0 0.0
  %108 = vmatpush.msra.mxu0 0.0
  %109 = vmatpush.msra.mxu0 0.0
  %110 = vmatpush.msra.mxu0 0.0
  %111 = vmatpush.msra.mxu0 %v75
  %112 = vmatmul.f32.gmra.mxu0 %v91
  %v113 = vpop.f32.mrf.mxu0
  %v114 = vadd.f32 %v81, %v113
  %115 = vmatmul.f32.gmra.mxu0 %v94
  %v116 = vpop.f32.mrf.mxu0
  %v117 = vadd.f32 %v81, %v116
  %118 = vdwg.mxu0
  %119 = vmatpush.msra.mxu0 0.0
  %120 = vmatpush.msra.mxu0 0.0
  %121 = vmatpush.msra.mxu0 0.0
  %122 = vmatpush.msra.mxu0 0.0
  %123 = vmatpush.msra.mxu0 0.0
  %124 = vmatpush.msra.mxu0 0.0
  %125 = vmatpush.msra.mxu0 0.0
  %126 = vmatpush.msra.mxu0 0.0
  %127 = vmatpush.msra.mxu0 0.0
  %128 = vmatpush.msra.mxu0 0.0
  %129 = vmatpush.msra.mxu0 0.0
  %130 = vmatpush.msra.mxu0 0.0
  %131 = vmatpush.msra.mxu0 0.0
  %132 = vmatpush.msra.mxu0 0.0
  %133 = vmatpush.msra.mxu0 0.0
  %134 = vmatpush.msra.mxu0 %v76
  %135 = vmatmul.f32.gmra.mxu0 %v91
  %v136 = vpop.f32.mrf.mxu0
  %v137 = vadd.f32 %v82, %v136
  %138 = vmatmul.f32.gmra.mxu0 %v94
  %v139 = vpop.f32.mrf.mxu0
  %v140 = vadd.f32 %v82, %v139
  %141 = vdwg.mxu0
  %142 = vmatpush.msra.mxu0 0.0
  %143 = vmatpush.msra.mxu0 0.0
  %144 = vmatpush.msra.mxu0 0.0
  %145 = vmatpush.msra.mxu0 0.0
  %146 = vmatpush.msra.mxu0 0.0
  %147 = vmatpush.msra.mxu0 0.0
  %148 = vmatpush.msra.mxu0 0.0
  %149 = vmatpush.msra.mxu0 0.0
  %150 = vmatpush.msra.mxu0 0.0
  %151 = vmatpush.msra.mxu0 0.0
  %152 = vmatpush.msra.mxu0 0.0
  %153 = vmatpush.msra.mxu0 0.0
  %154 = vmatpush.msra.mxu0 0.0
  %155 = vmatpush.msra.mxu0 0.0
  %156 = vmatpush.msra.mxu0 0.0
  %157 = vmatpush.msra.mxu0 %v77
  %158 = vmatmul.f32.gmra.mxu0 %v91
  %v159 = vpop.f32.mrf.mxu0
  %v160 = vadd.f32 %v83, %v159
  %161 = vmatmul.f32.gmra.mxu0 %v94
  %v162 = vpop.f32.mrf.mxu0
  %v163 = vadd.f32 %v83, %v162
  %164 = vdwg.mxu0
  %165 = vmatpush.msra.mxu0 0.0
  %166 = vmatpush.msra.mxu0 0.0
  %167 = vmatpush.msra.mxu0 0.0
  %168 = vmatpush.msra.mxu0 0.0
  %169 = vmatpush.msra.mxu0 0.0
  %170 = vmatpush.msra.mxu0 0.0
  %171 = vmatpush.msra.mxu0 0.0
  %172 = vmatpush.msra.mxu0 0.0
  %173 = vmatpush.msra.mxu0 0.0
  %174 = vmatpush.msra.mxu0 0.0
  %175 = vmatpush.msra.mxu0 0.0
  %176 = vmatpush.msra.mxu0 0.0
  %177 = vmatpush.msra.mxu0 0.0
  %178 = vmatpush.msra.mxu0 0.0
  %179 = vmatpush.msra.mxu0 0.0
  %180 = vmatpush.msra.mxu0 %v78
  %181 = vmatmul.f32.gmra.mxu0 %v91
  %v182 = vpop.f32.mrf.mxu0
  %v183 = vadd.f32 %v84, %v182
  %184 = vmatmul.f32.gmra.mxu0 %v94
  %v185 = vpop.f32.mrf.mxu0
  %v186 = vadd.f32 %v84, %v185
  %187 = vdwg.mxu0
  %v188 = vld [vmem:[%s4] sm:$0xf]
  %v189 = vld [vmem:[%s5] sm:$0xf]
  %v190 = vadd.f32 %v114, %v117
  %v191 = vrot.slane %v190, 4
  %v192 = vadd.f32 %v190, %v191
  %v193 = vrot.slane %v192, 2
  %v194 = vadd.f32 %v192, %v193
  %v195 = vrot.slane %v194, 1
  %v196 = vadd.f32 %v194, %v195
  %v197 = vadd.f32 %v137, %v140
  %v198 = vrot.slane %v197, 4
  %v199 = vadd.f32 %v197, %v198
  %v200 = vrot.slane %v199, 2
  %v201 = vadd.f32 %v199, %v200
  %v202 = vrot.slane %v201, 1
  %v203 = vadd.f32 %v201, %v202
  %v204 = vadd.f32 %v160, %v163
  %v205 = vrot.slane %v204, 4
  %v206 = vadd.f32 %v204, %v205
  %v207 = vrot.slane %v206, 2
  %v208 = vadd.f32 %v206, %v207
  %v209 = vrot.slane %v208, 1
  %v210 = vadd.f32 %v208, %v209
  %v211 = vadd.f32 %v183, %v186
  %v212 = vrot.slane %v211, 4
  %v213 = vadd.f32 %v211, %v212
  %v214 = vrot.slane %v213, 2
  %v215 = vadd.f32 %v213, %v214
  %v216 = vrot.slane %v215, 1
  %v217 = vadd.f32 %v215, %v216
  %v218 = vrcp.pop 16.0
  %v219 = vmul.f32 16.0, %v218
  %v220 = vsub.f32 1.0, %v219
  %v221 = vmul.f32 %v218, %v220
  %v222 = vadd.f32 %v218, %v221
  %vm223 = vweird.f32 %v218
  %v224 = vsel %vm223, %v218, %v222
  %v225 = vmul.f32 %v196, %v224
  %v226 = vmul.f32 %v203, %v224
  %v227 = vmul.f32 %v210, %v224
  %v228 = vmul.f32 %v217, %v224
  %v229 = vsub.f32 %v114, %v225
  %v230 = vsub.f32 %v137, %v226
  %v231 = vsub.f32 %v160, %v227
  %v232 = vsub.f32 %v183, %v228
  %v233 = vsub.f32 %v117, %v225
  %v234 = vsub.f32 %v140, %v226
  %v235 = vsub.f32 %v163, %v227
  %v236 = vsub.f32 %v186, %v228
  %v237 = vmul.f32 %v229, %v229
  %v238 = vmul.f32 %v230, %v230
  %v239 = vmul.f32 %v231, %v231
  %v240 = vmul.f32 %v232, %v232
  %v241 = vmul.f32 %v233, %v233
  %v242 = vmul.f32 %v234, %v234
  %v243 = vmul.f32 %v235, %v235
  %v244 = vmul.f32 %v236, %v236
  %v245 = vadd.f32 %v237, %v241
  %v246 = vrot.slane %v245, 4
  %v247 = vadd.f32 %v245, %v246
  %v248 = vrot.slane %v247, 2
  %v249 = vadd.f32 %v247, %v248
  %v250 = vrot.slane %v249, 1
  %v251 = vadd.f32 %v249, %v250
  %v252 = vadd.f32 %v238, %v242
  %v253 = vrot.slane %v252, 4
  %v254 = vadd.f32 %v252, %v253
  %v255 = vrot.slane %v254, 2
  %v256 = vadd.f32 %v254, %v255
  %v257 = vrot.slane %v256, 1
  %v258 = vadd.f32 %v256, %v257
  %v259 = vadd.f32 %v239, %v243
  %v260 = vrot.slane %v259, 4
  %v261 = vadd.f32 %v259, %v260
  %v262 = vrot.slane %v261, 2
  %v263 = vadd.f32 %v261, %v262
  %v264 = vrot.slane %v263, 1
  %v265 = vadd.f32 %v263, %v264
  %v266 = vadd.f32 %v240, %v244
  %v267 = vrot.slane %v266, 4
  %v268 = vadd.f32 %v266, %v267
  %v269 = vrot.slane %v268, 2
  %v270 = vadd.f32 %v268, %v269
  %v271 = vrot.slane %v270, 1
  %v272 = vadd.f32 %v270, %v271
  %v273 = vmul.f32 %v251, %v224
  %v274 = vmul.f32 %v258, %v224
  %v275 = vmul.f32 %v265, %v224
  %v276 = vmul.f32 %v272, %v224
  %v278 = vperm.slane %v188, 0
  %v279 = vperm.slane %v188, 1
  %v280 = vperm.slane %v188, 2
  %v281 = vperm.slane %v188, 3
  %v286 = vmul.f32 %v278, %v229
  %v287 = vmul.f32 %v279, %v230
  %v288 = vmul.f32 %v280, %v231
  %v289 = vmul.f32 %v281, %v232
  %v290 = vmul.f32 %v278, %v233
  %v291 = vmul.f32 %v279, %v234
  %v292 = vmul.f32 %v280, %v235
  %v293 = vmul.f32 %v281, %v236
  %v294 = vadd.f32 %v273, 1e-05
  %v295 = vadd.f32 %v274, 1e-05
  %v296 = vadd.f32 %v275, 1e-05
  %v297 = vadd.f32 %v276, 1e-05
  %v298 = vrsqrt.pop %v294
  %v299 = vmul.f32 %v298, %v294
  %v300 = vmul.f32 %v299, %v298
  %v301 = vmul.f32 0.5, %v300
  %v302 = vsub.f32 1.5, %v301
  %v303 = vmul.f32 %v298, %v302
  %vm304 = vweird.f32 %v294
  %vm305 = vweird.f32 %v298
  %vm306 = vmor %vm304, %vm305
  %v307 = vsel %vm306, %v298, %v303
  %v308 = vrsqrt.pop %v295
  %v309 = vmul.f32 %v308, %v295
  %v310 = vmul.f32 %v309, %v308
  %v311 = vmul.f32 0.5, %v310
  %v312 = vsub.f32 1.5, %v311
  %v313 = vmul.f32 %v308, %v312
  %vm314 = vweird.f32 %v295
  %vm315 = vweird.f32 %v308
  %vm316 = vmor %vm314, %vm315
  %v317 = vsel %vm316, %v308, %v313
  %v318 = vrsqrt.pop %v296
  %v319 = vmul.f32 %v318, %v296
  %v320 = vmul.f32 %v319, %v318
  %v321 = vmul.f32 0.5, %v320
  %v322 = vsub.f32 1.5, %v321
  %v323 = vmul.f32 %v318, %v322
  %vm324 = vweird.f32 %v296
  %vm325 = vweird.f32 %v318
  %vm326 = vmor %vm324, %vm325
  %v327 = vsel %vm326, %v318, %v323
  %v328 = vrsqrt.pop %v297
  %v329 = vmul.f32 %v328, %v297
  %v330 = vmul.f32 %v329, %v328
  %v331 = vmul.f32 0.5, %v330
  %v332 = vsub.f32 1.5, %v331
  %v333 = vmul.f32 %v328, %v332
  %vm334 = vweird.f32 %v297
  %vm335 = vweird.f32 %v328
  %vm336 = vmor %vm334, %vm335
  %v337 = vsel %vm336, %v328, %v333
  %v338 = vmul.f32 %v286, %v307
  %v339 = vmul.f32 %v287, %v317
  %v340 = vmul.f32 %v288, %v327
  %v341 = vmul.f32 %v289, %v337
  %v342 = vmul.f32 %v290, %v307
  %v343 = vmul.f32 %v291, %v317
  %v344 = vmul.f32 %v292, %v327
  %v345 = vmul.f32 %v293, %v337
  %v347 = vperm.slane %v189, 0
  %v348 = vperm.slane %v189, 1
  %v349 = vperm.slane %v189, 2
  %v350 = vperm.slane %v189, 3
  %v355 = vadd.f32 %v338, %v347
  %v356 = vadd.f32 %v339, %v348
  %v357 = vadd.f32 %v340, %v349
  %v358 = vadd.f32 %v341, %v350
  %v359 = vadd.f32 %v342, %v347
  %v360 = vadd.f32 %v343, %v348
  %v361 = vadd.f32 %v344, %v349
  %v362 = vadd.f32 %v345, %v350
  %v363 = vmax.f32 %v355, 0.0
  %v364 = vmax.f32 %v356, 0.0
  %v365 = vmax.f32 %v357, 0.0
  %v366 = vmax.f32 %v358, 0.0
  %v367 = vmax.f32 %v359, 0.0
  %v368 = vmax.f32 %v360, 0.0
  %v369 = vmax.f32 %v361, 0.0
  %v370 = vmax.f32 %v362, 0.0
  %v371 = vld [vmem:[%s6] sm:$0xff]
  %v372 = vld [vmem:[%s6 + $0x8] sm:$0xff]
  %v373 = vld [vmem:[%s6 + $0x10] sm:$0xff]
  %v374 = vld [vmem:[%s6 + $0x18] sm:$0xff]
  %v375 = vld [vmem:[%s6 + $0x20] sm:$0xff]
  %v376 = vld [vmem:[%s6 + $0x28] sm:$0xff]
  %v377 = vld [vmem:[%s6 + $0x30] sm:$0xff]
  %v378 = vld [vmem:[%s6 + $0x38] sm:$0xff]
  %v379 = vld [vmem:[%s6 + $0x40] sm:$0xff]
  %v380 = vld [vmem:[%s6 + $0x48] sm:$0xff]
  %v381 = vld [vmem:[%s6 + $0x50] sm:$0xff]
  %v382 = vld [vmem:[%s6 + $0x58] sm:$0xff]
  %v383 = vld [vmem:[%s6 + $0x60] sm:$0xff]
  %v384 = vld [vmem:[%s6 + $0x68] sm:$0xff]
  %v385 = vld [vmem:[%s6 + $0x70] sm:$0xff]
  %v386 = vld [vmem:[%s6 + $0x78] sm:$0xff]
  %v387 = vld [vmem:[%s6 + $0x80] sm:$0xff]
  %v388 = vld [vmem:[%s6 + $0x88] sm:$0xff]
  %v389 = vld [vmem:[%s6 + $0x90] sm:$0xff]
  %v390 = vld [vmem:[%s6 + $0x98] sm:$0xff]
  %v391 = vld [vmem:[%s6 + $0xa0] sm:$0xff]
  %v392 = vld [vmem:[%s6 + $0xa8] sm:$0xff]
  %v393 = vld [vmem:[%s6 + $0xb0] sm:$0xff]
  %v394 = vld [vmem:[%s6 + $0xb8] sm:$0xff]
  %v395 = vld [vmem:[%s6 + $0xc0] sm:$0xff]
  %v396 = vld [vmem:[%s6 + $0xc8] sm:$0xff]
  %v397 = vld [vmem:[%s6 + $0xd0] sm:$0xff]
  %v398 = vld [vmem:[%s6 + $0xd8] sm:$0xff]
  %v399 = vld [vmem:[%s6 + $0xe0] sm:$0xff]
  %v400 = vld [vmem:[%s6 + $0xe8] sm:$0xff]
  %v401 = vld [vmem:[%s6 + $0xf0] sm:$0xff]
  %v402 = vld [vmem:[%s6 + $0xf8] sm:$0xff]
  %v403 = vld [vmem:[%s6 + $0x100] sm:$0xff]
  %v404 = vld [vmem:[%s6 + $0x108] sm:$0xff]
  %v405 = vld [vmem:[%s6 + $0x110] sm:$0xff]
  %v406 = vld [vmem:[%s6 + $0x118] sm:$0xff]
  %v407 = vld [vmem:[%s6 + $0x120] sm:$0xff]
  %v408 = vld [vmem:[%s6 + $0x128] sm:$0xff]
  %v409 = vld [vmem:[%s6 + $0x130] sm:$0xff]
  %v410 = vld [vmem:[%s6 + $0x138] sm:$0xff]
  %v411 = vld [vmem:[%s6 + $0x140] sm:$0xff]
  %v412 = vld [vmem:[%s6 + $0x148] sm:$0xff]
  %v413 = vld [vmem:[%s6 + $0x150] sm:$0xff]
  %v414 = vld [vmem:[%s6 + $0x158] sm:$0xff]
  %v415 = vld [vmem:[%s6 + $0x160] sm:$0xff]
  %v416 = vld [vmem:[%s6 + $0x168] sm:$0xff]
  %v417 = vld [vmem:[%s6 + $0x170] sm:$0xff]
  %v418 = vld [vmem:[%s6 + $0x178] sm:$0xff]
  %v419 = vld [vmem:[%s6 + $0x180] sm:$0xff]
  %v420 = vld [vmem:[%s6 + $0x188] sm:$0xff]
  %v421 = vld [vmem:[%s6 + $0x190] sm:$0xff]
  %v422 = vld [vmem:[%s6 + $0x198] sm:$0xff]
  %v423 = vld [vmem:[%s6 + $0x1a0] sm:$0xff]
  %v424 = vld [vmem:[%s6 + $0x1a8] sm:$0xff]
  %v425 = vld [vmem:[%s6 + $0x1b0] sm:$0xff]
  %v426 = vld [vmem:[%s6 + $0x1b8] sm:$0xff]
  %v427 = vld [vmem:[%s6 + $0x1c0] sm:$0xff]
  %v428 = vld [vmem:[%s6 + $0x1c8] sm:$0xff]
  %v429 = vld [vmem:[%s6 + $0x1d0] sm:$0xff]
  %v430 = vld [vmem:[%s6 + $0x1d8] sm:$0xff]
  %v431 = vld [vmem:[%s6 + $0x1e0] sm:$0xff]
  %v432 = vld [vmem:[%s6 + $0x1e8] sm:$0xff]
  %v433 = vld [vmem:[%s6 + $0x1f0] sm:$0xff]
  %v434 = vld [vmem:[%s6 + $0x1f8] sm:$0xff]
  %v435 = vld [vmem:[%s6 + $0x200] sm:$0xff]
  %v436 = vld [vmem:[%s6 + $0x208] sm:$0xff]
  %v437 = vld [vmem:[%s6 + $0x210] sm:$0xff]
  %v438 = vld [vmem:[%s6 + $0x218] sm:$0xff]
  %v439 = vld [vmem:[%s6 + $0x220] sm:$0xff]
  %v440 = vld [vmem:[%s6 + $0x228] sm:$0xff]
  %v441 = vld [vmem:[%s6 + $0x230] sm:$0xff]
  %v442 = vld [vmem:[%s6 + $0x238] sm:$0xff]
  %v443 = vld [vmem:[%s6 + $0x240] sm:$0xff]
  %v444 = vld [vmem:[%s6 + $0x248] sm:$0xff]
  %v445 = vld [vmem:[%s6 + $0x250] sm:$0xff]
  %v446 = vld [vmem:[%s6 + $0x258] sm:$0xff]
  %v447 = vld [vmem:[%s6 + $0x260] sm:$0xff]
  %v448 = vld [vmem:[%s6 + $0x268] sm:$0xff]
  %v449 = vld [vmem:[%s6 + $0x270] sm:$0xff]
  %v450 = vld [vmem:[%s6 + $0x278] sm:$0xff]
  %v451 = vld [vmem:[%s6 + $0x280] sm:$0xff]
  %v452 = vld [vmem:[%s6 + $0x288] sm:$0xff]
  %v453 = vld [vmem:[%s6 + $0x290] sm:$0xff]
  %v454 = vld [vmem:[%s6 + $0x298] sm:$0xff]
  %v455 = vld [vmem:[%s6 + $0x2a0] sm:$0xff]
  %v456 = vld [vmem:[%s6 + $0x2a8] sm:$0xff]
  %v457 = vld [vmem:[%s6 + $0x2b0] sm:$0xff]
  %v458 = vld [vmem:[%s6 + $0x2b8] sm:$0xff]
  %v459 = vld [vmem:[%s6 + $0x2c0] sm:$0xff]
  %v460 = vld [vmem:[%s6 + $0x2c8] sm:$0xff]
  %v461 = vld [vmem:[%s6 + $0x2d0] sm:$0xff]
  %v462 = vld [vmem:[%s6 + $0x2d8] sm:$0xff]
  %v463 = vld [vmem:[%s6 + $0x2e0] sm:$0xff]
  %v464 = vld [vmem:[%s6 + $0x2e8] sm:$0xff]
  %v465 = vld [vmem:[%s6 + $0x2f0] sm:$0xff]
  %v466 = vld [vmem:[%s6 + $0x2f8] sm:$0xff]
  %v467 = vld [vmem:[%s6 + $0x300] sm:$0xff]
  %v468 = vld [vmem:[%s6 + $0x308] sm:$0xff]
  %v469 = vld [vmem:[%s6 + $0x310] sm:$0xff]
  %v470 = vld [vmem:[%s6 + $0x318] sm:$0xff]
  %v471 = vld [vmem:[%s6 + $0x320] sm:$0xff]
  %v472 = vld [vmem:[%s6 + $0x328] sm:$0xff]
  %v473 = vld [vmem:[%s6 + $0x330] sm:$0xff]
  %v474 = vld [vmem:[%s6 + $0x338] sm:$0xff]
  %v475 = vld [vmem:[%s6 + $0x340] sm:$0xff]
  %v476 = vld [vmem:[%s6 + $0x348] sm:$0xff]
  %v477 = vld [vmem:[%s6 + $0x350] sm:$0xff]
  %v478 = vld [vmem:[%s6 + $0x358] sm:$0xff]
  %v479 = vld [vmem:[%s6 + $0x360] sm:$0xff]
  %v480 = vld [vmem:[%s6 + $0x368] sm:$0xff]
  %v481 = vld [vmem:[%s6 + $0x370] sm:$0xff]
  %v482 = vld [vmem:[%s6 + $0x378] sm:$0xff]
  %v483 = vld [vmem:[%s6 + $0x380] sm:$0xff]
  %v484 = vld [vmem:[%s6 + $0x388] sm:$0xff]
  %v485 = vld [vmem:[%s6 + $0x390] sm:$0xff]
  %v486 = vld [vmem:[%s6 + $0x398] sm:$0xff]
  %v487 = vld [vmem:[%s6 + $0x3a0] sm:$0xff]
  %v488 = vld [vmem:[%s6 + $0x3a8] sm:$0xff]
  %v489 = vld [vmem:[%s6 + $0x3b0] sm:$0xff]
  %v490 = vld [vmem:[%s6 + $0x3b8] sm:$0xff]
  %v491 = vld [vmem:[%s6 + $0x3c0] sm:$0xff]
  %v492 = vld [vmem:[%s6 + $0x3c8] sm:$0xff]
  %v493 = vld [vmem:[%s6 + $0x3d0] sm:$0xff]
  %v494 = vld [vmem:[%s6 + $0x3d8] sm:$0xff]
  %v495 = vld [vmem:[%s6 + $0x3e0] sm:$0xff]
  %v496 = vld [vmem:[%s6 + $0x3e8] sm:$0xff]
  %v497 = vld [vmem:[%s6 + $0x3f0] sm:$0xff]
  %v498 = vld [vmem:[%s6 + $0x3f8] sm:$0xff]
  %v499 = vld [vmem:[%s6 + $0x400] sm:$0xff]
  %v500 = vld [vmem:[%s6 + $0x408] sm:$0xff]
  %v501 = vld [vmem:[%s6 + $0x410] sm:$0xff]
  %v502 = vld [vmem:[%s6 + $0x418] sm:$0xff]
  %v503 = vld [vmem:[%s6 + $0x420] sm:$0xff]
  %v504 = vld [vmem:[%s6 + $0x428] sm:$0xff]
  %v505 = vld [vmem:[%s6 + $0x430] sm:$0xff]
  %v506 = vld [vmem:[%s6 + $0x438] sm:$0xff]
  %v507 = vld [vmem:[%s6 + $0x440] sm:$0xff]
  %v508 = vld [vmem:[%s6 + $0x448] sm:$0xff]
  %v509 = vld [vmem:[%s6 + $0x450] sm:$0xff]
  %v510 = vld [vmem:[%s6 + $0x458] sm:$0xff]
  %v511 = vld [vmem:[%s6 + $0x460] sm:$0xff]
  %v512 = vld [vmem:[%s6 + $0x468] sm:$0xff]
  %v513 = vld [vmem:[%s6 + $0x470] sm:$0xff]
  %v514 = vld [vmem:[%s6 + $0x478] sm:$0xff]
  %v515 = vld [vmem:[%s6 + $0x480] sm:$0xff]
  %v516 = vld [vmem:[%s6 + $0x488] sm:$0xff]
  %v517 = vld [vmem:[%s6 + $0x490] sm:$0xff]
  %v518 = vld [vmem:[%s6 + $0x498] sm:$0xff]
  %v519 = vld [vmem:[%s6 + $0x4a0] sm:$0xff]
  %v520 = vld [vmem:[%s6 + $0x4a8] sm:$0xff]
  %v521 = vld [vmem:[%s6 + $0x4b0] sm:$0xff]
  %v522 = vld [vmem:[%s6 + $0x4b8] sm:$0xff]
  %v523 = vld [vmem:[%s6 + $0x4c0] sm:$0xff]
  %v524 = vld [vmem:[%s6 + $0x4c8] sm:$0xff]
  %v525 = vld [vmem:[%s6 + $0x4d0] sm:$0xff]
  %v526 = vld [vmem:[%s6 + $0x4d8] sm:$0xff]
  %v527 = vld [vmem:[%s6 + $0x4e0] sm:$0xff]
  %v528 = vld [vmem:[%s6 + $0x4e8] sm:$0xff]
  %v529 = vld [vmem:[%s6 + $0x4f0] sm:$0xff]
  %v530 = vld [vmem:[%s6 + $0x4f8] sm:$0xff]
  %v531 = vld [vmem:[%s6 + $0x500] sm:$0xff]
  %v532 = vld [vmem:[%s6 + $0x508] sm:$0xff]
  %v533 = vld [vmem:[%s6 + $0x510] sm:$0xff]
  %v534 = vld [vmem:[%s6 + $0x518] sm:$0xff]
  %v535 = vld [vmem:[%s6 + $0x520] sm:$0xff]
  %v536 = vld [vmem:[%s6 + $0x528] sm:$0xff]
  %v537 = vld [vmem:[%s6 + $0x530] sm:$0xff]
  %v538 = vld [vmem:[%s6 + $0x538] sm:$0xff]
  %v539 = vld [vmem:[%s6 + $0x540] sm:$0xff]
  %v540 = vld [vmem:[%s6 + $0x548] sm:$0xff]
  %v541 = vld [vmem:[%s6 + $0x550] sm:$0xff]
  %v542 = vld [vmem:[%s6 + $0x558] sm:$0xff]
  %v543 = vld [vmem:[%s6 + $0x560] sm:$0xff]
  %v544 = vld [vmem:[%s6 + $0x568] sm:$0xff]
  %v545 = vld [vmem:[%s6 + $0x570] sm:$0xff]
  %v546 = vld [vmem:[%s6 + $0x578] sm:$0xff]
  %v547 = vld [vmem:[%s6 + $0x580] sm:$0xff]
  %v548 = vld [vmem:[%s6 + $0x588] sm:$0xff]
  %v549 = vld [vmem:[%s6 + $0x590] sm:$0xff]
  %v550 = vld [vmem:[%s6 + $0x598] sm:$0xff]
  %v551 = vld [vmem:[%s6 + $0x5a0] sm:$0xff]
  %v552 = vld [vmem:[%s6 + $0x5a8] sm:$0xff]
  %v553 = vld [vmem:[%s6 + $0x5b0] sm:$0xff]
  %v554 = vld [vmem:[%s6 + $0x5b8] sm:$0xff]
  %v555 = vld [vmem:[%s6 + $0x5c0] sm:$0xff]
  %v556 = vld [vmem:[%s6 + $0x5c8] sm:$0xff]
  %v557 = vld [vmem:[%s6 + $0x5d0] sm:$0xff]
  %v558 = vld [vmem:[%s6 + $0x5d8] sm:$0xff]
  %v559 = vld [vmem:[%s6 + $0x5e0] sm:$0xff]
  %v560 = vld [vmem:[%s6 + $0x5e8] sm:$0xff]
  %v561 = vld [vmem:[%s6 + $0x5f0] sm:$0xff]
  %v562 = vld [vmem:[%s6 + $0x5f8] sm:$0xff]
  %563 = vmatpush.msra.mxu0 %v416
  %564 = vmatpush.msra.mxu0 %v413
  %565 = vmatpush.msra.mxu0 %v410
  %566 = vmatpush.msra.mxu0 %v407
  %567 = vmatpush.msra.mxu0 %v404
  %568 = vmatpush.msra.mxu0 %v401
  %569 = vmatpush.msra.mxu0 %v398
  %570 = vmatpush.msra.mxu0 %v395
  %571 = vmatpush.msra.mxu0 %v392
  %572 = vmatpush.msra.mxu0 %v389
  %573 = vmatpush.msra.mxu0 %v386
  %574 = vmatpush.msra.mxu0 %v383
  %575 = vmatpush.msra.mxu0 %v380
  %576 = vmatpush.msra.mxu0 %v377
  %577 = vmatpush.msra.mxu0 %v374
  %578 = vmatpush.msra.mxu0 %v371
  %579 = vmatmul.f32.gmra.mxu0 %v363
  %v580 = vpop.f32.mrf.mxu0
  %v581 = vadd.f32 0.0, %v580
  %582 = vmatmul.f32.gmra.mxu0 %v367
  %v583 = vpop.f32.mrf.mxu0
  %v584 = vadd.f32 0.0, %v583
  %585 = vdwg.mxu0
  %586 = vmatpush.msra.mxu0 %v464
  %587 = vmatpush.msra.mxu0 %v461
  %588 = vmatpush.msra.mxu0 %v458
  %589 = vmatpush.msra.mxu0 %v455
  %590 = vmatpush.msra.mxu0 %v452
  %591 = vmatpush.msra.mxu0 %v449
  %592 = vmatpush.msra.mxu0 %v446
  %593 = vmatpush.msra.mxu0 %v443
  %594 = vmatpush.msra.mxu0 %v440
  %595 = vmatpush.msra.mxu0 %v437
  %596 = vmatpush.msra.mxu0 %v434
  %597 = vmatpush.msra.mxu0 %v431
  %598 = vmatpush.msra.mxu0 %v428
  %599 = vmatpush.msra.mxu0 %v425
  %600 = vmatpush.msra.mxu0 %v422
  %601 = vmatpush.msra.mxu0 %v419
  %602 = vmatmul.f32.gmra.mxu0 %v364
  %v603 = vpop.f32.mrf.mxu0
  %v604 = vadd.f32 %v581, %v603
  %605 = vmatmul.f32.gmra.mxu0 %v368
  %v606 = vpop.f32.mrf.mxu0
  %v607 = vadd.f32 %v584, %v606
  %608 = vdwg.mxu0
  %609 = vmatpush.msra.mxu0 %v512
  %610 = vmatpush.msra.mxu0 %v509
  %611 = vmatpush.msra.mxu0 %v506
  %612 = vmatpush.msra.mxu0 %v503
  %613 = vmatpush.msra.mxu0 %v500
  %614 = vmatpush.msra.mxu0 %v497
  %615 = vmatpush.msra.mxu0 %v494
  %616 = vmatpush.msra.mxu0 %v491
  %617 = vmatpush.msra.mxu0 %v488
  %618 = vmatpush.msra.mxu0 %v485
  %619 = vmatpush.msra.mxu0 %v482
  %620 = vmatpush.msra.mxu0 %v479
  %621 = vmatpush.msra.mxu0 %v476
  %622 = vmatpush.msra.mxu0 %v473
  %623 = vmatpush.msra.mxu0 %v470
  %624 = vmatpush.msra.mxu0 %v467
  %625 = vmatmul.f32.gmra.mxu0 %v365
  %v626 = vpop.f32.mrf.mxu0
  %v627 = vadd.f32 %v604, %v626
  %628 = vmatmul.f32.gmra.mxu0 %v369
  %v629 = vpop.f32.mrf.mxu0
  %v630 = vadd.f32 %v607, %v629
  %631 = vdwg.mxu0
  %632 = vmatpush.msra.mxu0 %v560
  %633 = vmatpush.msra.mxu0 %v557
  %634 = vmatpush.msra.mxu0 %v554
  %635 = vmatpush.msra.mxu0 %v551
  %636 = vmatpush.msra.mxu0 %v548
  %637 = vmatpush.msra.mxu0 %v545
  %638 = vmatpush.msra.mxu0 %v542
  %639 = vmatpush.msra.mxu0 %v539
  %640 = vmatpush.msra.mxu0 %v536
  %641 = vmatpush.msra.mxu0 %v533
  %642 = vmatpush.msra.mxu0 %v530
  %643 = vmatpush.msra.mxu0 %v527
  %644 = vmatpush.msra.mxu0 %v524
  %645 = vmatpush.msra.mxu0 %v521
  %646 = vmatpush.msra.mxu0 %v518
  %647 = vmatpush.msra.mxu0 %v515
  %648 = vmatmul.f32.gmra.mxu0 %v366
  %v649 = vpop.f32.mrf.mxu0
  %v650 = vadd.f32 %v627, %v649
  %651 = vmatmul.f32.gmra.mxu0 %v370
  %v652 = vpop.f32.mrf.mxu0
  %v653 = vadd.f32 %v630, %v652
  %654 = vdwg.mxu0
  %655 = vmatpush.msra.mxu0 %v417
  %656 = vmatpush.msra.mxu0 %v414
  %657 = vmatpush.msra.mxu0 %v411
  %658 = vmatpush.msra.mxu0 %v408
  %659 = vmatpush.msra.mxu0 %v405
  %660 = vmatpush.msra.mxu0 %v402
  %661 = vmatpush.msra.mxu0 %v399
  %662 = vmatpush.msra.mxu0 %v396
  %663 = vmatpush.msra.mxu0 %v393
  %664 = vmatpush.msra.mxu0 %v390
  %665 = vmatpush.msra.mxu0 %v387
  %666 = vmatpush.msra.mxu0 %v384
  %667 = vmatpush.msra.mxu0 %v381
  %668 = vmatpush.msra.mxu0 %v378
  %669 = vmatpush.msra.mxu0 %v375
  %670 = vmatpush.msra.mxu0 %v372
  %671 = vmatmul.f32.gmra.mxu0 %v363
  %v672 = vpop.f32.mrf.mxu0
  %v673 = vadd.f32 0.0, %v672
  %674 = vmatmul.f32.gmra.mxu0 %v367
  %v675 = vpop.f32.mrf.mxu0
  %v676 = vadd.f32 0.0, %v675
  %677 = vdwg.mxu0
  %678 = vmatpush.msra.mxu0 %v465
  %679 = vmatpush.msra.mxu0 %v462
  %680 = vmatpush.msra.mxu0 %v459
  %681 = vmatpush.msra.mxu0 %v456
  %682 = vmatpush.msra.mxu0 %v453
  %683 = vmatpush.msra.mxu0 %v450
  %684 = vmatpush.msra.mxu0 %v447
  %685 = vmatpush.msra.mxu0 %v444
  %686 = vmatpush.msra.mxu0 %v441
  %687 = vmatpush.msra.mxu0 %v438
  %688 = vmatpush.msra.mxu0 %v435
  %689 = vmatpush.msra.mxu0 %v432
  %690 = vmatpush.msra.mxu0 %v429
  %691 = vmatpush.msra.mxu0 %v426
  %692 = vmatpush.msra.mxu0 %v423
  %693 = vmatpush.msra.mxu0 %v420
  %694 = vmatmul.f32.gmra.mxu0 %v364
  %v695 = vpop.f32.mrf.mxu0
  %v696 = vadd.f32 %v673, %v695
  %697 = vmatmul.f32.gmra.mxu0 %v368
  %v698 = vpop.f32.mrf.mxu0
  %v699 = vadd.f32 %v676, %v698
  %700 = vdwg.mxu0
  %701 = vmatpush.msra.mxu0 %v513
  %702 = vmatpush.msra.mxu0 %v510
  %703 = vmatpush.msra.mxu0 %v507
  %704 = vmatpush.msra.mxu0 %v504
  %705 = vmatpush.msra.mxu0 %v501
  %706 = vmatpush.msra.mxu0 %v498
  %707 = vmatpush.msra.mxu0 %v495
  %708 = vmatpush.msra.mxu0 %v492
  %709 = vmatpush.msra.mxu0 %v489
  %710 = vmatpush.msra.mxu0 %v486
  %711 = vmatpush.msra.mxu0 %v483
  %712 = vmatpush.msra.mxu0 %v480
  %713 = vmatpush.msra.mxu0 %v477
  %714 = vmatpush.msra.mxu0 %v474
  %715 = vmatpush.msra.mxu0 %v471
  %716 = vmatpush.msra.mxu0 %v468
  %717 = vmatmul.f32.gmra.mxu0 %v365
  %v718 = vpop.f32.mrf.mxu0
  %v719 = vadd.f32 %v696, %v718
  %720 = vmatmul.f32.gmra.mxu0 %v369
  %v721 = vpop.f32.mrf.mxu0
  %v722 = vadd.f32 %v699, %v721
  %723 = vdwg.mxu0
  %724 = vmatpush.msra.mxu0 %v561
  %725 = vmatpush.msra.mxu0 %v558
  %726 = vmatpush.msra.mxu0 %v555
  %727 = vmatpush.msra.mxu0 %v552
  %728 = vmatpush.msra.mxu0 %v549
  %729 = vmatpush.msra.mxu0 %v546
  %730 = vmatpush.msra.mxu0 %v543
  %731 = vmatpush.msra.mxu0 %v540
  %732 = vmatpush.msra.mxu0 %v537
  %733 = vmatpush.msra.mxu0 %v534
  %734 = vmatpush.msra.mxu0 %v531
  %735 = vmatpush.msra.mxu0 %v528
  %736 = vmatpush.msra.mxu0 %v525
  %737 = vmatpush.msra.mxu0 %v522
  %738 = vmatpush.msra.mxu0 %v519
  %739 = vmatpush.msra.mxu0 %v516
  %740 = vmatmul.f32.gmra.mxu0 %v366
  %v741 = vpop.f32.mrf.mxu0
  %v742 = vadd.f32 %v719, %v741
  %743 = vmatmul.f32.gmra.mxu0 %v370
  %v744 = vpop.f32.mrf.mxu0
  %v745 = vadd.f32 %v722, %v744
  %746 = vdwg.mxu0
  %747 = vmatpush.msra.mxu0 %v418
  %748 = vmatpush.msra.mxu0 %v415
  %749 = vmatpush.msra.mxu0 %v412
  %750 = vmatpush.msra.mxu0 %v409
  %751 = vmatpush.msra.mxu0 %v406
  %752 = vmatpush.msra.mxu0 %v403
  %753 = vmatpush.msra.mxu0 %v400
  %754 = vmatpush.msra.mxu0 %v397
  %755 = vmatpush.msra.mxu0 %v394
  %756 = vmatpush.msra.mxu0 %v391
  %757 = vmatpush.msra.mxu0 %v388
  %758 = vmatpush.msra.mxu0 %v385
  %759 = vmatpush.msra.mxu0 %v382
  %760 = vmatpush.msra.mxu0 %v379
  %761 = vmatpush.msra.mxu0 %v376
  %762 = vmatpush.msra.mxu0 %v373
  %763 = vmatmul.f32.gmra.mxu0 %v363
  %v764 = vpop.f32.mrf.mxu0
  %v765 = vadd.f32 0.0, %v764
  %766 = vmatmul.f32.gmra.mxu0 %v367
  %v767 = vpop.f32.mrf.mxu0
  %v768 = vadd.f32 0.0, %v767
  %769 = vdwg.mxu0
  %770 = vmatpush.msra.mxu0 %v466
  %771 = vmatpush.msra.mxu0 %v463
  %772 = vmatpush.msra.mxu0 %v460
  %773 = vmatpush.msra.mxu0 %v457
  %774 = vmatpush.msra.mxu0 %v454
  %775 = vmatpush.msra.mxu0 %v451
  %776 = vmatpush.msra.mxu0 %v448
  %777 = vmatpush.msra.mxu0 %v445
  %778 = vmatpush.msra.mxu0 %v442
  %779 = vmatpush.msra.mxu0 %v439
  %780 = vmatpush.msra.mxu0 %v436
  %781 = vmatpush.msra.mxu0 %v433
  %782 = vmatpush.msra.mxu0 %v430
  %783 = vmatpush.msra.mxu0 %v427
  %784 = vmatpush.msra.mxu0 %v424
  %785 = vmatpush.msra.mxu0 %v421
  %786 = vmatmul.f32.gmra.mxu0 %v364
  %v787 = vpop.f32.mrf.mxu0
  %v788 = vadd.f32 %v765, %v787
  %789 = vmatmul.f32.gmra.mxu0 %v368
  %v790 = vpop.f32.mrf.mxu0
  %v791 = vadd.f32 %v768, %v790
  %792 = vdwg.mxu0
  %793 = vmatpush.msra.mxu0 %v514
  %794 = vmatpush.msra.mxu0 %v511
  %795 = vmatpush.msra.mxu0 %v508
  %796 = vmatpush.msra.mxu0 %v505
  %797 = vmatpush.msra.mxu0 %v502
  %798 = vmatpush.msra.mxu0 %v499
  %799 = vmatpush.msra.mxu0 %v496
  %800 = vmatpush.msra.mxu0 %v493
  %801 = vmatpush.msra.mxu0 %v490
  %802 = vmatpush.msra.mxu0 %v487
  %803 = vmatpush.msra.mxu0 %v484
  %804 = vmatpush.msra.mxu0 %v481
  %805 = vmatpush.msra.mxu0 %v478
  %806 = vmatpush.msra.mxu0 %v475
  %807 = vmatpush.msra.mxu0 %v472
  %808 = vmatpush.msra.mxu0 %v469
  %809 = vmatmul.f32.gmra.mxu0 %v365
  %v810 = vpop.f32.mrf.mxu0
  %v811 = vadd.f32 %v788, %v810
  %812 = vmatmul.f32.gmra.mxu0 %v369
  %v813 = vpop.f32.mrf.mxu0
  %v814 = vadd.f32 %v791, %v813
  %815 = vdwg.mxu0
  %816 = vmatpush.msra.mxu0 %v562
  %817 = vmatpush.msra.mxu0 %v559
  %818 = vmatpush.msra.mxu0 %v556
  %819 = vmatpush.msra.mxu0 %v553
  %820 = vmatpush.msra.mxu0 %v550
  %821 = vmatpush.msra.mxu0 %v547
  %822 = vmatpush.msra.mxu0 %v544
  %823 = vmatpush.msra.mxu0 %v541
  %824 = vmatpush.msra.mxu0 %v538
  %825 = vmatpush.msra.mxu0 %v535
  %826 = vmatpush.msra.mxu0 %v532
  %827 = vmatpush.msra.mxu0 %v529
  %828 = vmatpush.msra.mxu0 %v526
  %829 = vmatpush.msra.mxu0 %v523
  %830 = vmatpush.msra.mxu0 %v520
  %831 = vmatpush.msra.mxu0 %v517
  %832 = vmatmul.f32.gmra.mxu0 %v366
  %v833 = vpop.f32.mrf.mxu0
  %v834 = vadd.f32 %v811, %v833
  %835 = vmatmul.f32.gmra.mxu0 %v370
  %v836 = vpop.f32.mrf.mxu0
  %v837 = vadd.f32 %v814, %v836
  %838 = vdwg.mxu0
  %v839 = vld [vmem:[%s7] sm:$0x7]
  %v841 = vperm.slane %v839, 0
  %v842 = vperm.slane %v839, 1
  %v843 = vperm.slane %v839, 2
  %847 = vmatpush.msra.mxu0 0.0
  %848 = vmatpush.msra.mxu0 0.0
  %849 = vmatpush.msra.mxu0 0.0
  %850 = vmatpush.msra.mxu0 0.0
  %851 = vmatpush.msra.mxu0 0.0
  %852 = vmatpush.msra.mxu0 0.0
  %853 = vmatpush.msra.mxu0 0.0
  %854 = vmatpush.msra.mxu0 0.0
  %855 = vmatpush.msra.mxu0 0.0
  %856 = vmatpush.msra.mxu0 0.0
  %857 = vmatpush.msra.mxu0 0.0
  %858 = vmatpush.msra.mxu0 0.0
  %859 = vmatpush.msra.mxu0 0.0
  %860 = vmatpush.msra.mxu0 0.0
  %861 = vmatpush.msra.mxu0 %v653
  %862 = vmatpush.msra.mxu0 %v650
  %863 = vmatmul.f32.gmra.mxu0 %v47
  %v864 = vpop.f32.mrf.mxu0
  %v865 = vadd.f32 %v841, %v864
  %866 = vmatmul.f32.gmra.mxu0 %v50
  %v867 = vpop.f32.mrf.mxu0
  %v868 = vadd.f32 %v841, %v867
  %869 = vdwg.mxu0
  %870 = vmatpush.msra.mxu0 0.0
  %871 = vmatpush.msra.mxu0 0.0
  %872 = vmatpush.msra.mxu0 0.0
  %873 = vmatpush.msra.mxu0 0.0
  %874 = vmatpush.msra.mxu0 0.0
  %875 = vmatpush.msra.mxu0 0.0
  %876 = vmatpush.msra.mxu0 0.0
  %877 = vmatpush.msra.mxu0 0.0
  %878 = vmatpush.msra.mxu0 0.0
  %879 = vmatpush.msra.mxu0 0.0
  %880 = vmatpush.msra.mxu0 0.0
  %881 = vmatpush.msra.mxu0 0.0
  %882 = vmatpush.msra.mxu0 0.0
  %883 = vmatpush.msra.mxu0 0.0
  %884 = vmatpush.msra.mxu0 %v745
  %885 = vmatpush.msra.mxu0 %v742
  %886 = vmatmul.f32.gmra.mxu0 %v47
  %v887 = vpop.f32.mrf.mxu0
  %v888 = vadd.f32 %v842, %v887
  %889 = vmatmul.f32.gmra.mxu0 %v50
  %v890 = vpop.f32.mrf.mxu0
  %v891 = vadd.f32 %v842, %v890
  %892 = vdwg.mxu0
  %893 = vmatpush.msra.mxu0 0.0
  %894 = vmatpush.msra.mxu0 0.0
  %895 = vmatpush.msra.mxu0 0.0
  %896 = vmatpush.msra.mxu0 0.0
  %897 = vmatpush.msra.mxu0 0.0
  %898 = vmatpush.msra.mxu0 0.0
  %899 = vmatpush.msra.mxu0 0.0
  %900 = vmatpush.msra.mxu0 0.0
  %901 = vmatpush.msra.mxu0 0.0
  %902 = vmatpush.msra.mxu0 0.0
  %903 = vmatpush.msra.mxu0 0.0
  %904 = vmatpush.msra.mxu0 0.0
  %905 = vmatpush.msra.mxu0 0.0
  %906 = vmatpush.msra.mxu0 0.0
  %907 = vmatpush.msra.mxu0 %v837
  %908 = vmatpush.msra.mxu0 %v834
  %909 = vmatmul.f32.gmra.mxu0 %v47
  %v910 = vpop.f32.mrf.mxu0
  %v911 = vadd.f32 %v843, %v910
  %912 = vmatmul.f32.gmra.mxu0 %v50
  %v913 = vpop.f32.mrf.mxu0
  %v914 = vadd.f32 %v843, %v913
  %915 = vdwg.mxu0
  %v916 = vld [vmem:[%s8] sm:$0x7]
  %v917 = vld [vmem:[%s9] sm:$0x7]
  %v918 = vadd.f32 %v865, %v868
  %v919 = vrot.slane %v918, 4
  %v920 = vadd.f32 %v918, %v919
  %v921 = vrot.slane %v920, 2
  %v922 = vadd.f32 %v920, %v921
  %v923 = vrot.slane %v922, 1
  %v924 = vadd.f32 %v922, %v923
  %v925 = vadd.f32 %v888, %v891
  %v926 = vrot.slane %v925, 4
  %v927 = vadd.f32 %v925, %v926
  %v928 = vrot.slane %v927, 2
  %v929 = vadd.f32 %v927, %v928
  %v930 = vrot.slane %v929, 1
  %v931 = vadd.f32 %v929, %v930
  %v932 = vadd.f32 %v911, %v914
  %v933 = vrot.slane %v932, 4
  %v934 = vadd.f32 %v932, %v933
  %v935 = vrot.slane %v934, 2
  %v936 = vadd.f32 %v934, %v935
  %v937 = vrot.slane %v936, 1
  %v938 = vadd.f32 %v936, %v937
  %v939 = vmul.f32 %v924, %v224
  %v940 = vmul.f32 %v931, %v224
  %v941 = vmul.f32 %v938, %v224
  %v942 = vsub.f32 %v865, %v939
  %v943 = vsub.f32 %v888, %v940
  %v944 = vsub.f32 %v911, %v941
  %v945 = vsub.f32 %v868, %v939
  %v946 = vsub.f32 %v891, %v940
  %v947 = vsub.f32 %v914, %v941
  %v948 = vmul.f32 %v942, %v942
  %v949 = vmul.f32 %v943, %v943
  %v950 = vmul.f32 %v944, %v944
  %v951 = vmul.f32 %v945, %v945
  %v952 = vmul.f32 %v946, %v946
  %v953 = vmul.f32 %v947, %v947
  %v954 = vadd.f32 %v948, %v951
  %v955 = vrot.slane %v954, 4
  %v956 = vadd.f32 %v954, %v955
  %v957 = vrot.slane %v956, 2
  %v958 = vadd.f32 %v956, %v957
  %v959 = vrot.slane %v958, 1
  %v960 = vadd.f32 %v958, %v959
  %v961 = vadd.f32 %v949, %v952
  %v962 = vrot.slane %v961, 4
  %v963 = vadd.f32 %v961, %v962
  %v964 = vrot.slane %v963, 2
  %v965 = vadd.f32 %v963, %v964
  %v966 = vrot.slane %v965, 1
  %v967 = vadd.f32 %v965, %v966
  %v968 = vadd.f32 %v950, %v953
  %v969 = vrot.slane %v968, 4
  %v970 = vadd.f32 %v968, %v969
  %v971 = vrot.slane %v970, 2
  %v972 = vadd.f32 %v970, %v971
  %v973 = vrot.slane %v972, 1
  %v974 = vadd.f32 %v972, %v973
  %v975 = vmul.f32 %v960, %v224
  %v976 = vmul.f32 %v967, %v224
  %v977 = vmul.f32 %v974, %v224
  %v979 = vperm.slane %v916, 0
  %v980 = vperm.slane %v916, 1
  %v981 = vperm.slane %v916, 2
  %v985 = vmul.f32 %v979, %v942
  %v986 = vmul.f32 %v980, %v943
  %v987 = vmul.f32 %v981, %v944
  %v988 = vmul.f32 %v979, %v945
  %v989 = vmul.f32 %v980, %v946
  %v990 = vmul.f32 %v981, %v947
  %v991 = vadd.f32 %v975, 1e-05
  %v992 = vadd.f32 %v976, 1e-05
  %v993 = vadd.f32 %v977, 1e-05
  %v994 = vrsqrt.pop %v991
  %v995 = vmul.f32 %v994, %v991
  %v996 = vmul.f32 %v995, %v994
  %v997 = vmul.f32 0.5, %v996
  %v998 = vsub.f32 1.5, %v997
  %v999 = vmul.f32 %v994, %v998
  %vm1000 = vweird.f32 %v991
  %vm1001 = vweird.f32 %v994
  %vm1002 = vmor %vm1000, %vm1001
  %v1003 = vsel %vm1002, %v994, %v999
  %v1004 = vrsqrt.pop %v992
  %v1005 = vmul.f32 %v1004, %v992
  %v1006 = vmul.f32 %v1005, %v1004
  %v1007 = vmul.f32 0.5, %v1006
  %v1008 = vsub.f32 1.5, %v1007
  %v1009 = vmul.f32 %v1004, %v1008
  %vm1010 = vweird.f32 %v992
  %vm1011 = vweird.f32 %v1004
  %vm1012 = vmor %vm1010, %vm1011
  %v1013 = vsel %vm1012, %v1004, %v1009
  %v1014 = vrsqrt.pop %v993
  %v1015 = vmul.f32 %v1014, %v993
  %v1016 = vmul.f32 %v1015, %v1014
  %v1017 = vmul.f32 0.5, %v1016
  %v1018 = vsub.f32 1.5, %v1017
  %v1019 = vmul.f32 %v1014, %v1018
  %vm1020 = vweird.f32 %v993
  %vm1021 = vweird.f32 %v1014
  %vm1022 = vmor %vm1020, %vm1021
  %v1023 = vsel %vm1022, %v1014, %v1019
  %v1024 = vmul.f32 %v985, %v1003
  %v1025 = vmul.f32 %v986, %v1013
  %v1026 = vmul.f32 %v987, %v1023
  %v1027 = vmul.f32 %v988, %v1003
  %v1028 = vmul.f32 %v989, %v1013
  %v1029 = vmul.f32 %v990, %v1023
  %v1031 = vperm.slane %v917, 0
  %v1032 = vperm.slane %v917, 1
  %v1033 = vperm.slane %v917, 2
  %v1037 = vadd.f32 %v1024, %v1031
  %v1038 = vadd.f32 %v1025, %v1032
  %v1039 = vadd.f32 %v1026, %v1033
  %v1040 = vadd.f32 %v1027, %v1031
  %v1041 = vadd.f32 %v1028, %v1032
  %v1042 = vadd.f32 %v1029, %v1033
  %v1043 = vmax.f32 %v1037, 0.0
  %v1044 = vmax.f32 %v1038, 0.0
  %v1045 = vmax.f32 %v1039, 0.0
  %v1046 = vmax.f32 %v1040, 0.0
  %v1047 = vmax.f32 %v1041, 0.0
  %v1048 = vmax.f32 %v1042, 0.0
  %v1049 = vld [vmem:[%s10] sm:$0xff]
  %v1050 = vld [vmem:[%s10 + $0x8] sm:$0xff]
  %v1051 = vld [vmem:[%s10 + $0x10] sm:$0xff]
  %v1052 = vld [vmem:[%s10 + $0x18] sm:$0xff]
  %v1053 = vld [vmem:[%s10 + $0x20] sm:$0xff]
  %v1054 = vld [vmem:[%s10 + $0x28] sm:$0xff]
  %v1055 = vld [vmem:[%s10 + $0x30] sm:$0xff]
  %v1056 = vld [vmem:[%s10 + $0x38] sm:$0xff]
  %v1057 = vld [vmem:[%s10 + $0x40] sm:$0xff]
  %v1058 = vld [vmem:[%s10 + $0x48] sm:$0xff]
  %v1059 = vld [vmem:[%s10 + $0x50] sm:$0xff]
  %v1060 = vld [vmem:[%s10 + $0x58] sm:$0xff]
  %v1061 = vld [vmem:[%s10 + $0x60] sm:$0xff]
  %v1062 = vld [vmem:[%s10 + $0x68] sm:$0xff]
  %v1063 = vld [vmem:[%s10 + $0x70] sm:$0xff]
  %v1064 = vld [vmem:[%s10 + $0x78] sm:$0xff]
  %v1065 = vld [vmem:[%s10 + $0x80] sm:$0xff]
  %v1066 = vld [vmem:[%s10 + $0x88] sm:$0xff]
  %v1067 = vld [vmem:[%s10 + $0x90] sm:$0xff]
  %v1068 = vld [vmem:[%s10 + $0x98] sm:$0xff]
  %v1069 = vld [vmem:[%s10 + $0xa0] sm:$0xff]
  %v1070 = vld [vmem:[%s10 + $0xa8] sm:$0xff]
  %v1071 = vld [vmem:[%s10 + $0xb0] sm:$0xff]
  %v1072 = vld [vmem:[%s10 + $0xb8] sm:$0xff]
  %v1073 = vld [vmem:[%s10 + $0xc0] sm:$0xff]
  %v1074 = vld [vmem:[%s10 + $0xc8] sm:$0xff]
  %v1075 = vld [vmem:[%s10 + $0xd0] sm:$0xff]
  %v1076 = vld [vmem:[%s10 + $0xd8] sm:$0xff]
  %v1077 = vld [vmem:[%s10 + $0xe0] sm:$0xff]
  %v1078 = vld [vmem:[%s10 + $0xe8] sm:$0xff]
  %v1079 = vld [vmem:[%s10 + $0xf0] sm:$0xff]
  %v1080 = vld [vmem:[%s10 + $0xf8] sm:$0xff]
  %v1081 = vld [vmem:[%s10 + $0x100] sm:$0xff]
  %v1082 = vld [vmem:[%s10 + $0x108] sm:$0xff]
  %v1083 = vld [vmem:[%s10 + $0x110] sm:$0xff]
  %v1084 = vld [vmem:[%s10 + $0x118] sm:$0xff]
  %v1085 = vld [vmem:[%s10 + $0x120] sm:$0xff]
  %v1086 = vld [vmem:[%s10 + $0x128] sm:$0xff]
  %v1087 = vld [vmem:[%s10 + $0x130] sm:$0xff]
  %v1088 = vld [vmem:[%s10 + $0x138] sm:$0xff]
  %v1089 = vld [vmem:[%s10 + $0x140] sm:$0xff]
  %v1090 = vld [vmem:[%s10 + $0x148] sm:$0xff]
  %v1091 = vld [vmem:[%s10 + $0x150] sm:$0xff]
  %v1092 = vld [vmem:[%s10 + $0x158] sm:$0xff]
  %v1093 = vld [vmem:[%s10 + $0x160] sm:$0xff]
  %v1094 = vld [vmem:[%s10 + $0x168] sm:$0xff]
  %v1095 = vld [vmem:[%s10 + $0x170] sm:$0xff]
  %v1096 = vld [vmem:[%s10 + $0x178] sm:$0xff]
  %v1097 = vld [vmem:[%s11] sm:$0x1]
  %v1099 = vperm.slane %v1097, 0
  %1101 = vmatpush.msra.mxu0 %v1064
  %1102 = vmatpush.msra.mxu0 %v1063
  %1103 = vmatpush.msra.mxu0 %v1062
  %1104 = vmatpush.msra.mxu0 %v1061
  %1105 = vmatpush.msra.mxu0 %v1060
  %1106 = vmatpush.msra.mxu0 %v1059
  %1107 = vmatpush.msra.mxu0 %v1058
  %1108 = vmatpush.msra.mxu0 %v1057
  %1109 = vmatpush.msra.mxu0 %v1056
  %1110 = vmatpush.msra.mxu0 %v1055
  %1111 = vmatpush.msra.mxu0 %v1054
  %1112 = vmatpush.msra.mxu0 %v1053
  %1113 = vmatpush.msra.mxu0 %v1052
  %1114 = vmatpush.msra.mxu0 %v1051
  %1115 = vmatpush.msra.mxu0 %v1050
  %1116 = vmatpush.msra.mxu0 %v1049
  %1117 = vmatmul.f32.gmra.mxu0 %v1043
  %v1118 = vpop.f32.mrf.mxu0
  %v1119 = vadd.f32 %v1099, %v1118
  %1120 = vmatmul.f32.gmra.mxu0 %v1046
  %v1121 = vpop.f32.mrf.mxu0
  %v1122 = vadd.f32 %v1099, %v1121
  %1123 = vdwg.mxu0
  %1124 = vmatpush.msra.mxu0 %v1080
  %1125 = vmatpush.msra.mxu0 %v1079
  %1126 = vmatpush.msra.mxu0 %v1078
  %1127 = vmatpush.msra.mxu0 %v1077
  %1128 = vmatpush.msra.mxu0 %v1076
  %1129 = vmatpush.msra.mxu0 %v1075
  %1130 = vmatpush.msra.mxu0 %v1074
  %1131 = vmatpush.msra.mxu0 %v1073
  %1132 = vmatpush.msra.mxu0 %v1072
  %1133 = vmatpush.msra.mxu0 %v1071
  %1134 = vmatpush.msra.mxu0 %v1070
  %1135 = vmatpush.msra.mxu0 %v1069
  %1136 = vmatpush.msra.mxu0 %v1068
  %1137 = vmatpush.msra.mxu0 %v1067
  %1138 = vmatpush.msra.mxu0 %v1066
  %1139 = vmatpush.msra.mxu0 %v1065
  %1140 = vmatmul.f32.gmra.mxu0 %v1044
  %v1141 = vpop.f32.mrf.mxu0
  %v1142 = vadd.f32 %v1119, %v1141
  %1143 = vmatmul.f32.gmra.mxu0 %v1047
  %v1144 = vpop.f32.mrf.mxu0
  %v1145 = vadd.f32 %v1122, %v1144
  %1146 = vdwg.mxu0
  %1147 = vmatpush.msra.mxu0 %v1096
  %1148 = vmatpush.msra.mxu0 %v1095
  %1149 = vmatpush.msra.mxu0 %v1094
  %1150 = vmatpush.msra.mxu0 %v1093
  %1151 = vmatpush.msra.mxu0 %v1092
  %1152 = vmatpush.msra.mxu0 %v1091
  %1153 = vmatpush.msra.mxu0 %v1090
  %1154 = vmatpush.msra.mxu0 %v1089
  %1155 = vmatpush.msra.mxu0 %v1088
  %1156 = vmatpush.msra.mxu0 %v1087
  %1157 = vmatpush.msra.mxu0 %v1086
  %1158 = vmatpush.msra.mxu0 %v1085
  %1159 = vmatpush.msra.mxu0 %v1084
  %1160 = vmatpush.msra.mxu0 %v1083
  %1161 = vmatpush.msra.mxu0 %v1082
  %1162 = vmatpush.msra.mxu0 %v1081
  %1163 = vmatmul.f32.gmra.mxu0 %v1045
  %v1164 = vpop.f32.mrf.mxu0
  %v1165 = vadd.f32 %v1142, %v1164
  %1166 = vmatmul.f32.gmra.mxu0 %v1048
  %v1167 = vpop.f32.mrf.mxu0
  %v1168 = vadd.f32 %v1145, %v1167
  %1169 = vdwg.mxu0
  %v1170 = vmax.f32 %v1165, 0.0
  %v1171 = vmax.f32 %v1168, 0.0
  %v1172 = vlaneseq
  %v1173 = vand.u32 %v1172, 127
  %vm1174 = vcmp.lt.s32.totalorder %v1173, 6
  %v1175 = vsel %vm1174, %v1170, -inf
  %v1176 = vsel %vm1174, %v1171, -inf
  %1177 = vmax.xlane.f32.xlu0 %v1175
  %v1178 = vpop.xlane.xlu0 %1177
  %1179 = vmax.xlane.f32.xlu0 %v1176
  %v1180 = vpop.xlane.xlu0 %1179
  %v1181 = vsub.f32 %v1175, %v1178
  %v1182 = vsub.f32 %v1176, %v1180
  %v1183 = vmul.f32 %v1181, 1.442695
  %v1184 = vpow.pop %v1183
  %v1185 = vmul.f32 %v1182, 1.442695
  %v1186 = vpow.pop %v1185
  %1187 = vadd.xlane.f32.xlu0 %v1184
  %v1188 = vpop.xlane.xlu0 %1187
  %1189 = vadd.xlane.f32.xlu0 %v1186
  %v1190 = vpop.xlane.xlu0 %1189
  %v1191 = vlog2.pop %v1188
  %v1192 = vmul.f32 %v1191, 0.6931472
  %v1193 = vlog2.pop %v1190
  %v1194 = vmul.f32 %v1193, 0.6931472
  %v1195 = vsub.f32 %v1181, %v1192
  %v1196 = vsub.f32 %v1182, %v1194
  %1197 = vst [vmem:[%s12] sm:$0xff] %v1195
  %1198 = vst [vmem:[%s12 + $0x8] sm:$0xff] %v1196
  // Predicated region
  $region50: #{gcn_forward.1} parent=0 // pred_check
    _
  $region51: #{gcn_forward.1} parent=0 // pred_check_branch
    %1200 = sbr.rel (0) target = $region53
  $region52: #{gcn_forward.1} parent=0 // pred_region
    _
  $region53: #{gcn_forward.1} parent=0 // pred_fallthru
    _
  // Predicated region
  $region54: #{gcn_forward.1} parent=0 // pred_check
    _
  $region55: #{gcn_forward.1} parent=0 // pred_check_branch
    %1202 = sbr.rel (0) target = $region57
  $region56: #{gcn_forward.1} parent=0 // pred_region
    _
  $region57: #{gcn_forward.1} parent=0 // pred_fallthru
    _

</llo_original>
